<compile_context>
chip_gen: v7x
topology: tpu7x:2x2x1
jax: 0.10.0
libtpu: 0.0.40
codegen_flags: <defaults>
</compile_context>

<pallas_src>
import functools

import jax
import jax.numpy as jnp
from jax import lax
from jax.experimental import pallas as pl
from jax.experimental.pallas import tpu as pltpu


# --------------------------------------------------------------------------- #
# Pallas kernel:  out[R, TP] = W[R, F] @ X[F, TP] + shift[R, 1]  -> activation
# --------------------------------------------------------------------------- #
def _matmul_bias_act_kernel(w_ref, x_ref, shift_ref, o_ref, *, activation):
    y = jnp.dot(w_ref[...], x_ref[...], preferred_element_type=jnp.float32)  # MXU, f32 acc
    y = y + shift_ref[...]                       # conv bias (+ folded BN shift)
    if activation == "relu":
        y = jnp.maximum(y, 0.0)
    elif activation == "sigmoid":
        y = 1.0 / (1.0 + jnp.exp(-y))            # exp lowers to the EUP slot
    o_ref[...] = y.astype(o_ref.dtype)           # lane-dense (TP multiple of 128) store


def _round_up(x, m):
    return (x + m - 1) // m * m


def matmul_bias_act(w_mat, x_fp, shift, activation="none", *, tp=512):
    """w_mat: (R, F) f32, x_fp: (F, P) f32, shift: (R,) f32  ->  (R, P) f32."""
    r, f = w_mat.shape
    p = x_fp.shape[1]
    # Lane-dense P tiling.  TP is chosen so that
    #   2*TP*(F+R)*2B (bf16, double-buffered) + R*F*2B + 2*TP*R*4B (f32 out)
    # stays well under the scoped-VMEM budget (32 MiB; v7x physical is 64 MiB).
    tp_eff = min(tp, _round_up(p, 128))
    p_pad = _round_up(p, tp_eff)
    if p_pad != p:
        x_fp = jnp.pad(x_fp, ((0, 0), (0, p_pad - p)))

    w_bf = w_mat.astype(jnp.bfloat16)            # bf16 MXU operands
    x_bf = x_fp.astype(jnp.bfloat16)
    shift2 = shift.reshape(r, 1).astype(jnp.float32)

    kernel = functools.partial(_matmul_bias_act_kernel, activation=activation)
    out = pl.pallas_call(
        kernel,
        out_shape=jax.ShapeDtypeStruct((r, p_pad), jnp.float32),
        grid_spec=pltpu.PrefetchScalarGridSpec(
            num_scalar_prefetch=0,
            grid=(p_pad // tp_eff,),
            in_specs=[
                pl.BlockSpec((r, f), lambda i: (0, 0)),        # weights (VMEM-resident)
                pl.BlockSpec((f, tp_eff), lambda i: (0, i)),   # F on sublanes, P on lanes
                pl.BlockSpec((r, 1), lambda i: (0, 0)),        # folded bias / BN shift
            ],
            out_specs=pl.BlockSpec((r, tp_eff), lambda i: (0, i)),
        ),
        compiler_params=pltpu.CompilerParams(
            dimension_semantics=("parallel",),
            vmem_limit_bytes=32 * 1024 * 1024,
        ),
        cost_estimate=pl.CostEstimate(
            flops=2 * r * f * p_pad,
            transcendentals=(r * p_pad) if activation == "sigmoid" else 0,
            bytes_accessed=(r * f + f * p_pad) * 2 + (r + r * p_pad) * 4,
        ),
    )(w_bf, x_bf, shift2)
    return out[:, :p] if p_pad != p else out


# --------------------------------------------------------------------------- #
# JAX glue. Activations are kept in (C, N, H, W) layout between layers so both
# im2col (-> (F, P)) and the kernel output (-> (Cout, N, Ho, Wo)) need no
# transposes.
# --------------------------------------------------------------------------- #
def _im2col(x_cnhw, k, stride, pad):
    """(C,N,H,W) -> (C*K*K, N*Ho*Wo); feature order (c, kh, kw)."""
    c, n, h, w = x_cnhw.shape
    xp = jnp.pad(x_cnhw, ((0, 0), (0, 0), (pad, pad), (pad, pad))) if pad else x_cnhw
    ho = (h + 2 * pad - k) // stride + 1
    wo = (w + 2 * pad - k) // stride + 1
    cols = []
    for kh in range(k):
        for kw in range(k):
            cols.append(xp[:, :, kh:kh + (ho - 1) * stride + 1:stride,
                               kw:kw + (wo - 1) * stride + 1:stride])
    patches = jnp.stack(cols, axis=1)            # (C, K*K, N, Ho, Wo)
    return patches.reshape(c * k * k, n * ho * wo), ho, wo


def conv2d(x_cnhw, weight, bias, *, stride=1, activation="none", bn=None, eps=1e-5):
    """weight: (Cout, Cin, K, K) torch layout; x: (Cin,N,H,W) -> (Cout,N,Ho,Wo)."""
    cout, cin, k, _ = weight.shape
    pad = (k - 1) // 2
    patches, ho, wo = _im2col(x_cnhw, k, stride, pad)
    w_mat = weight.reshape(cout, cin * k * k)    # matches patch feature order (c,kh,kw)
    if bn is not None:                           # fold BN(eval) scale into the weights
        scale = bn["gamma"] / jnp.sqrt(bn["var"] + eps)
        w_mat = w_mat * scale[:, None]
        shift = bn["beta"] + (bias - bn["mean"]) * scale
    else:
        shift = bias
    n = x_cnhw.shape[1]
    y = matmul_bias_act(w_mat, patches, shift, activation)
    return y.reshape(cout, n, ho, wo)


def conv_transpose2d(x_cnhw, weight, bias, k):
    """nn.ConvTranspose2d(cin, cout, k, stride=k): weight (Cin, Cout, k, k)."""
    cin, cout = weight.shape[0], weight.shape[1]
    _, n, h, w = x_cnhw.shape
    x_fp = x_cnhw.reshape(cin, n * h * w)
    w_mat = weight.reshape(cin, cout * k * k).T            # (Cout*k*k, Cin)
    shift = jnp.repeat(bias, k * k)                        # row order (co, i, j)
    y = matmul_bias_act(w_mat, x_fp, shift, "none")        # (Cout*k*k, N*H*W)
    y = y.reshape(cout, k, k, n, h, w)
    y = jnp.transpose(y, (0, 3, 4, 1, 5, 2))               # (Cout, N, H, i, W, j)
    return y.reshape(cout, n, h * k, w * k)


# ----------------------------- module forwards ------------------------------ #
def bb_conv_forward(bb_cnhw, p):
    x = conv2d(bb_cnhw, p["w1"], p["b1"], stride=p["stride"], activation="none")
    x = conv2d(x, p["w2"], p["b2"], stride=1, activation="sigmoid")
    return x


def stacked_conv_blocks_forward(x_cnhw, blocks):
    for blk in blocks:     # Conv -> BN(eval) -> ReLU -> Dropout2d(identity in eval)
        x_cnhw = conv2d(x_cnhw, blk["weight"], blk["bias"], stride=1,
                        activation="relu", bn=blk)
    return x_cnhw


def bb_unet_decoder_forward(skips_nchw, bb_nchw, params, *, deep_supervision=False):
    to_cnhw = lambda a: jnp.transpose(a, (1, 0, 2, 3))
    skips = [to_cnhw(s) for s in skips_nchw]
    bb = to_cnhw(bb_nchw)
    low = skips[-1]
    segs = []
    n_stages = len(params["stages"])
    for s in range(n_stages):
        bb_enc = bb_conv_forward(bb, params["bb_conv"][s])
        skip_bb = skips[-(s + 2)] * bb_enc
        tpp = params["transpose_conv"][s]
        x = conv_transpose2d(low, tpp["weight"], tpp["bias"], tpp["k"])
        x = jnp.concatenate([x, skip_bb], axis=0)          # channel cat (CNHW axis 0)
        x = stacked_conv_blocks_forward(x, params["stages"][s])
        if deep_supervision or s == n_stages - 1:
            sp = params["seg_conv"][s if deep_supervision else -1]
            segs.append(conv2d(x, sp["weight"], sp["bias"], stride=1, activation="none"))
        low = x
    segs = segs[::-1]
    outs = [jnp.transpose(o, (1, 0, 2, 3)) for o in segs]  # CNHW -> NCHW
    return outs if deep_supervision else outs[0]


# --------------------------- parameter construction ------------------------- #
def _uniform(key, shape, bound):
    return jax.random.uniform(key, shape, jnp.float32, -bound, bound)


def _conv_init(key, cout, cin, k):
    kw_, kb_ = jax.random.split(key)
    bound = 1.0 / float(cin * k * k) ** 0.5
    return _uniform(kw_, (cout, cin, k, k), bound), _uniform(kb_, (cout,), bound)


def _conv_transpose_init(key, cin, cout, k):
    kw_, kb_ = jax.random.split(key)
    bound = 1.0 / float(cout * k * k) ** 0.5
    return _uniform(kw_, (cin, cout, k, k), bound), _uniform(kb_, (cout,), bound)


def init_decoder_params(key, enc_out_channels, enc_strides, enc_kernel_sizes,
                        bb_stride, num_classes, deep_supervision, n_conv_per_stage=2):
    params = {"bb_conv": [], "transpose_conv": [], "stages": [], "seg_conv": []}
    n_enc = len(enc_out_channels)
    keys = iter(jax.random.split(key, 16 * n_enc))
    for s in range(1, n_enc):
        c_below = enc_out_channels[-s]
        c_skip = enc_out_channels[-(s + 1)]
        st_t = enc_strides[-s]
        k_stage = enc_kernel_sizes[-(s + 1)]
        # BBConv(1, c_skip, bb_pool_ratio[-s], bb_stride[-s]); pool_ratio unused in fwd.
        w1, b1 = _conv_init(next(keys), c_skip, 1, 3)
        w2, b2 = _conv_init(next(keys), c_skip, c_skip, 3)
        params["bb_conv"].append(dict(w1=w1, b1=b1, w2=w2, b2=b2, stride=bb_stride[-s]))
        wt, bt = _conv_transpose_init(next(keys), c_below, c_skip, st_t)
        params["transpose_conv"].append(dict(weight=wt, bias=bt, k=st_t))
        blocks, cin = [], 2 * c_skip
        for _ in range(n_conv_per_stage):
            w, b = _conv_init(next(keys), c_skip, cin, k_stage)
            blocks.append(dict(weight=w, bias=b,
                               gamma=jnp.ones((c_skip,), jnp.float32),
                               beta=jnp.zeros((c_skip,), jnp.float32),
                               mean=jnp.zeros((c_skip,), jnp.float32),
                               var=jnp.ones((c_skip,), jnp.float32)))
            cin = c_skip
        params["stages"].append(blocks)
        if deep_supervision or s == n_enc - 1:
            wsg, bsg = _conv_init(next(keys), num_classes, c_skip, 1)
            params["seg_conv"].append(dict(weight=wsg, bias=bsg))
    return params


# ------------------------------- JAX reference ------------------------------ #
def _ref_conv(x, w, b, stride, pad):
    y = lax.conv_general_dilated(x, w, (stride, stride), [(pad, pad), (pad, pad)],
                                 dimension_numbers=("NCHW", "OIHW", "NCHW"))
    return y + b[None, :, None, None]


def _ref_conv_transpose(x, w, b, k):
    w_oihw = jnp.flip(jnp.transpose(w, (1, 0, 2, 3)), axis=(2, 3))
    y = lax.conv_general_dilated(x, w_oihw, (1, 1), [(k - 1, k - 1), (k - 1, k - 1)],
                                 lhs_dilation=(k, k),
                                 dimension_numbers=("NCHW", "OIHW", "NCHW"))
    return y + b[None, :, None, None]


def ref_decoder(skips, bb, params, *, deep_supervision=False, eps=1e-5):
    low = skips[-1]
    segs = []
    n_stages = len(params["stages"])
    for s in range(n_stages):
        bp = params["bb_conv"][s]
        be = _ref_conv(bb, bp["w1"], bp["b1"], bp["stride"], 1)
        be = _ref_conv(be, bp["w2"], bp["b2"], 1, 1)
        be = jax.nn.sigmoid(be)
        skip_bb = skips[-(s + 2)] * be
        tpp = params["transpose_conv"][s]
        x = _ref_conv_transpose(low, tpp["weight"], tpp["bias"], tpp["k"])
        x = jnp.concatenate([x, skip_bb], axis=1)
        for blk in params["stages"][s]:
            k = blk["weight"].shape[-1]
            y = _ref_conv(x, blk["weight"], blk["bias"], 1, (k - 1) // 2)
            sc = blk["gamma"] / jnp.sqrt(blk["var"] + eps)
            y = (y - blk["mean"][None, :, None, None]) * sc[None, :, None, None] \
                + blk["beta"][None, :, None, None]
            x = jnp.maximum(y, 0.0)
        if deep_supervision or s == n_stages - 1:
            sp = params["seg_conv"][s if deep_supervision else -1]
            segs.append(_ref_conv(x, sp["weight"], sp["bias"], 1, 0))
        low = x
    segs = segs[::-1]
    return segs if deep_supervision else segs[0]


# ------------------------------------ main ---------------------------------- #
if __name__ == "__main__":
    # Encoder stub (out_channels / strides / kernel_sizes), deep_supervision=False.
    enc_out_channels = [4, 8, 16]
    enc_strides = [1, 2, 2]
    enc_kernel_sizes = [3, 3, 3]
    bb_stride = [1, 1, 2]     # bb_stride[-s] maps the 16x16 bb map to each skip's res
    num_classes = 3
    deep_supervision = False
    N = 2

    key = jax.random.PRNGKey(0)
    k0, k1, k2, kb, kp = jax.random.split(key, 5)
    skips = [jax.random.normal(k0, (N, 4, 16, 16), jnp.float32),
             jax.random.normal(k1, (N, 8, 8, 8), jnp.float32),
             jax.random.normal(k2, (N, 16, 4, 4), jnp.float32)]
    bb = jax.random.normal(kb, (N, 1, 16, 16), jnp.float32)

    params = init_decoder_params(kp, enc_out_channels, enc_strides, enc_kernel_sizes,
                                 bb_stride, num_classes, deep_supervision)

    fwd = jax.jit(lambda sk, b: bb_unet_decoder_forward(
        sk, b, params, deep_supervision=deep_supervision))
    out = jax.block_until_ready(fwd(skips, bb))

    ref = ref_decoder(skips, bb, params, deep_supervision=deep_supervision)
    assert out.shape == ref.shape == (N, num_classes, 16, 16), (out.shape, ref.shape)
    max_err = float(jnp.max(jnp.abs(out - ref)))
    # bf16 MXU operands (f32 accumulation) vs a pure-f32 XLA reference.
    assert max_err < 5e-2, f"mismatch vs JAX reference: {max_err}"
    print("KERNEL_OK")
</pallas_src>

<mosaic_0001>
module attributes {stable_mosaic.version = 11 : i64} {
  func.func @_matmul_bias_act_kernel(%arg0: i32, %arg1: memref<8x9xbf16, #tpu.memory_space<vmem>>, %arg2: memref<9x128xbf16, #tpu.memory_space<vmem>>, %arg3: memref<8x1xf32, #tpu.memory_space<vmem>>, %arg4: memref<8x128xf32, #tpu.memory_space<vmem>>) attributes {dimension_semantics = [#tpu.dimension_semantics<parallel>], iteration_bounds = array<i64: 1>, scalar_prefetch = 0 : i64, scratch_operands = 0 : i64, tpu.core_type = #tpu.core_type<tc>, window_params = [{pipeline_mode = #tpu.pipeline_mode<synchronous>, transform_indices = @transform_0, window_bounds = array<i64: 8, 9>}, {transform_indices = @transform_1, window_bounds = array<i64: 9, 128>}, {pipeline_mode = #tpu.pipeline_mode<synchronous>, transform_indices = @transform_2, window_bounds = array<i64: 8, 1>}, {transform_indices = @transform_3, window_bounds = array<i64: 8, 128>}]} {
    %c0 = arith.constant 0 : index
    %c0_0 = arith.constant 0 : index
    %0 = vector.load %arg1[%c0, %c0_0] : memref<8x9xbf16, #tpu.memory_space<vmem>>, vector<8x9xbf16>
    %c0_1 = arith.constant 0 : index
    %c0_2 = arith.constant 0 : index
    %1 = vector.load %arg2[%c0_1, %c0_2] : memref<9x128xbf16, #tpu.memory_space<vmem>>, vector<9x128xbf16>
    %cst = arith.constant dense<0.000000e+00> : vector<8x128xf32>
    %2 = tpu.matmul %0, %1, %cst {dimension_numbers = #tpu.dot_dimension_numbers<[1], [0], [0], [1], [0, 0, 1, 1], [], []>} : vector<8x9xbf16>, vector<9x128xbf16>, vector<8x128xf32> -> vector<8x128xf32>
    %c0_3 = arith.constant 0 : index
    %c0_4 = arith.constant 0 : index
    %3 = vector.load %arg3[%c0_3, %c0_4] : memref<8x1xf32, #tpu.memory_space<vmem>>, vector<8x1xf32>
    %4 = vector.broadcast %3 : vector<8x1xf32> to vector<8x128xf32>
    %5 = arith.addf %2, %4 : vector<8x128xf32>
    %c0_5 = arith.constant 0 : index
    %c0_6 = arith.constant 0 : index
    %6 = vector.load %arg4[%c0_5, %c0_6] : memref<8x128xf32, #tpu.memory_space<vmem>>, vector<8x128xf32>
    tpu.vector_store %arg4[%c0_5, %c0_6], %5 {strides = array<i32>} : memref<8x128xf32, #tpu.memory_space<vmem>>, vector<8x128xf32>,
    return
  }
  func.func @transform_0(%arg0: i32) -> (i32, i32) {
    %c0_i32 = arith.constant 0 : i32
    %c0_i32_0 = arith.constant 0 : i32
    %c0_i32_1 = arith.constant 0 : i32
    return %c0_i32, %c0_i32_0 : i32, i32
  }
  func.func @transform_1(%arg0: i32) -> (i32, i32) {
    %c0_i32 = arith.constant 0 : i32
    %c0_i32_0 = arith.constant 0 : i32
    return %c0_i32, %arg0 : i32, i32
  }
  func.func @transform_2(%arg0: i32) -> (i32, i32) {
    %c0_i32 = arith.constant 0 : i32
    %c0_i32_0 = arith.constant 0 : i32
    %c0_i32_1 = arith.constant 0 : i32
    return %c0_i32, %c0_i32_0 : i32, i32
  }
  func.func @transform_3(%arg0: i32) -> (i32, i32) {
    %c0_i32 = arith.constant 0 : i32
    %c0_i32_0 = arith.constant 0 : i32
    return %c0_i32, %arg0 : i32, i32
  }
}

module attributes {stable_mosaic.version = 11 : i64} {
  func.func @_matmul_bias_act_kernel(%arg0: i32, %arg1: memref<32x16xbf16, #tpu.memory_space<vmem>>, %arg2: memref<16x128xbf16, #tpu.memory_space<vmem>>, %arg3: memref<32x1xf32, #tpu.memory_space<vmem>>, %arg4: memref<32x128xf32, #tpu.memory_space<vmem>>) attributes {dimension_semantics = [#tpu.dimension_semantics<parallel>], iteration_bounds = array<i64: 1>, scalar_prefetch = 0 : i64, scratch_operands = 0 : i64, tpu.core_type = #tpu.core_type<tc>, window_params = [{pipeline_mode = #tpu.pipeline_mode<synchronous>, transform_indices = @transform_0, window_bounds = array<i64: 32, 16>}, {transform_indices = @transform_1, window_bounds = array<i64: 16, 128>}, {pipeline_mode = #tpu.pipeline_mode<synchronous>, transform_indices = @transform_2, window_bounds = array<i64: 32, 1>}, {transform_indices = @transform_3, window_bounds = array<i64: 32, 128>}]} {
    %c0 = arith.constant 0 : index
    %c0_0 = arith.constant 0 : index
    %0 = vector.load %arg1[%c0, %c0_0] : memref<32x16xbf16, #tpu.memory_space<vmem>>, vector<32x16xbf16>
    %c0_1 = arith.constant 0 : index
    %c0_2 = arith.constant 0 : index
    %1 = vector.load %arg2[%c0_1, %c0_2] : memref<16x128xbf16, #tpu.memory_space<vmem>>, vector<16x128xbf16>
    %cst = arith.constant dense<0.000000e+00> : vector<32x128xf32>
    %2 = tpu.matmul %0, %1, %cst {dimension_numbers = #tpu.dot_dimension_numbers<[1], [0], [0], [1], [0, 0, 1, 1], [], []>} : vector<32x16xbf16>, vector<16x128xbf16>, vector<32x128xf32> -> vector<32x128xf32>
    %c0_3 = arith.constant 0 : index
    %c0_4 = arith.constant 0 : index
    %3 = vector.load %arg3[%c0_3, %c0_4] : memref<32x1xf32, #tpu.memory_space<vmem>>, vector<32x1xf32>
    %4 = vector.broadcast %3 : vector<32x1xf32> to vector<32x128xf32>
    %5 = arith.addf %2, %4 : vector<32x128xf32>
    %c0_5 = arith.constant 0 : index
    %c0_6 = arith.constant 0 : index
    %6 = vector.load %arg4[%c0_5, %c0_6] : memref<32x128xf32, #tpu.memory_space<vmem>>, vector<32x128xf32>
    tpu.vector_store %arg4[%c0_5, %c0_6], %5 {strides = array<i32>} : memref<32x128xf32, #tpu.memory_space<vmem>>, vector<32x128xf32>,
    return
  }
  func.func @transform_0(%arg0: i32) -> (i32, i32) {
    %c0_i32 = arith.constant 0 : i32
    %c0_i32_0 = arith.constant 0 : i32
    %c0_i32_1 = arith.constant 0 : i32
    return %c0_i32, %c0_i32_0 : i32, i32
  }
  func.func @transform_1(%arg0: i32) -> (i32, i32) {
    %c0_i32 = arith.constant 0 : i32
    %c0_i32_0 = arith.constant 0 : i32
    return %c0_i32, %arg0 : i32, i32
  }
  func.func @transform_2(%arg0: i32) -> (i32, i32) {
    %c0_i32 = arith.constant 0 : i32
    %c0_i32_0 = arith.constant 0 : i32
    %c0_i32_1 = arith.constant 0 : i32
    return %c0_i32, %c0_i32_0 : i32, i32
  }
  func.func @transform_3(%arg0: i32) -> (i32, i32) {
    %c0_i32 = arith.constant 0 : i32
    %c0_i32_0 = arith.constant 0 : i32
    return %c0_i32, %arg0 : i32, i32
  }
}

module attributes {stable_mosaic.version = 11 : i64} {
  func.func @_matmul_bias_act_kernel(%arg0: i32, %arg1: memref<4x9xbf16, #tpu.memory_space<vmem>>, %arg2: memref<9x512xbf16, #tpu.memory_space<vmem>>, %arg3: memref<4x1xf32, #tpu.memory_space<vmem>>, %arg4: memref<4x512xf32, #tpu.memory_space<vmem>>) attributes {dimension_semantics = [#tpu.dimension_semantics<parallel>], iteration_bounds = array<i64: 1>, scalar_prefetch = 0 : i64, scratch_operands = 0 : i64, tpu.core_type = #tpu.core_type<tc>, window_params = [{pipeline_mode = #tpu.pipeline_mode<synchronous>, transform_indices = @transform_0, window_bounds = array<i64: 4, 9>}, {transform_indices = @transform_1, window_bounds = array<i64: 9, 512>}, {pipeline_mode = #tpu.pipeline_mode<synchronous>, transform_indices = @transform_2, window_bounds = array<i64: 4, 1>}, {transform_indices = @transform_3, window_bounds = array<i64: 4, 512>}]} {
    %c0 = arith.constant 0 : index
    %c0_0 = arith.constant 0 : index
    %0 = vector.load %arg1[%c0, %c0_0] : memref<4x9xbf16, #tpu.memory_space<vmem>>, vector<4x9xbf16>
    %c0_1 = arith.constant 0 : index
    %c0_2 = arith.constant 0 : index
    %1 = vector.load %arg2[%c0_1, %c0_2] : memref<9x512xbf16, #tpu.memory_space<vmem>>, vector<9x512xbf16>
    %cst = arith.constant dense<0.000000e+00> : vector<4x512xf32>
    %2 = tpu.matmul %0, %1, %cst {dimension_numbers = #tpu.dot_dimension_numbers<[1], [0], [0], [1], [0, 0, 1, 1], [], []>} : vector<4x9xbf16>, vector<9x512xbf16>, vector<4x512xf32> -> vector<4x512xf32>
    %c0_3 = arith.constant 0 : index
    %c0_4 = arith.constant 0 : index
    %3 = vector.load %arg3[%c0_3, %c0_4] : memref<4x1xf32, #tpu.memory_space<vmem>>, vector<4x1xf32>
    %4 = vector.broadcast %3 : vector<4x1xf32> to vector<4x512xf32>
    %5 = arith.addf %2, %4 : vector<4x512xf32>
    %c0_5 = arith.constant 0 : index
    %c0_6 = arith.constant 0 : index
    %6 = vector.load %arg4[%c0_5, %c0_6] : memref<4x512xf32, #tpu.memory_space<vmem>>, vector<4x512xf32>
    tpu.vector_store %arg4[%c0_5, %c0_6], %5 {strides = array<i32>} : memref<4x512xf32, #tpu.memory_space<vmem>>, vector<4x512xf32>,
    return
  }
  func.func @transform_0(%arg0: i32) -> (i32, i32) {
    %c0_i32 = arith.constant 0 : i32
    %c0_i32_0 = arith.constant 0 : i32
    %c0_i32_1 = arith.constant 0 : i32
    return %c0_i32, %c0_i32_0 : i32, i32
  }
  func.func @transform_1(%arg0: i32) -> (i32, i32) {
    %c0_i32 = arith.constant 0 : i32
    %c0_i32_0 = arith.constant 0 : i32
    return %c0_i32, %arg0 : i32, i32
  }
  func.func @transform_2(%arg0: i32) -> (i32, i32) {
    %c0_i32 = arith.constant 0 : i32
    %c0_i32_0 = arith.constant 0 : i32
    %c0_i32_1 = arith.constant 0 : i32
    return %c0_i32, %c0_i32_0 : i32, i32
  }
  func.func @transform_3(%arg0: i32) -> (i32, i32) {
    %c0_i32 = arith.constant 0 : i32
    %c0_i32_0 = arith.constant 0 : i32
    return %c0_i32, %arg0 : i32, i32
  }
}

module attributes {stable_mosaic.version = 11 : i64} {
  func.func @_matmul_bias_act_kernel(%arg0: i32, %arg1: memref<4x36xbf16, #tpu.memory_space<vmem>>, %arg2: memref<36x512xbf16, #tpu.memory_space<vmem>>, %arg3: memref<4x1xf32, #tpu.memory_space<vmem>>, %arg4: memref<4x512xf32, #tpu.memory_space<vmem>>) attributes {dimension_semantics = [#tpu.dimension_semantics<parallel>], iteration_bounds = array<i64: 1>, scalar_prefetch = 0 : i64, scratch_operands = 0 : i64, tpu.core_type = #tpu.core_type<tc>, window_params = [{pipeline_mode = #tpu.pipeline_mode<synchronous>, transform_indices = @transform_0, window_bounds = array<i64: 4, 36>}, {transform_indices = @transform_1, window_bounds = array<i64: 36, 512>}, {pipeline_mode = #tpu.pipeline_mode<synchronous>, transform_indices = @transform_2, window_bounds = array<i64: 4, 1>}, {transform_indices = @transform_3, window_bounds = array<i64: 4, 512>}]} {
    %c0 = arith.constant 0 : index
    %c0_0 = arith.constant 0 : index
    %0 = vector.load %arg1[%c0, %c0_0] : memref<4x36xbf16, #tpu.memory_space<vmem>>, vector<4x36xbf16>
    %c0_1 = arith.constant 0 : index
    %c0_2 = arith.constant 0 : index
    %1 = vector.load %arg2[%c0_1, %c0_2] : memref<36x512xbf16, #tpu.memory_space<vmem>>, vector<36x512xbf16>
    %cst = arith.constant dense<0.000000e+00> : vector<4x512xf32>
    %2 = tpu.matmul %0, %1, %cst {dimension_numbers = #tpu.dot_dimension_numbers<[1], [0], [0], [1], [0, 0, 1, 1], [], []>} : vector<4x36xbf16>, vector<36x512xbf16>, vector<4x512xf32> -> vector<4x512xf32>
    %c0_3 = arith.constant 0 : index
    %c0_4 = arith.constant 0 : index
    %3 = vector.load %arg3[%c0_3, %c0_4] : memref<4x1xf32, #tpu.memory_space<vmem>>, vector<4x1xf32>
    %4 = vector.broadcast %3 : vector<4x1xf32> to vector<4x512xf32>
    %5 = arith.addf %2, %4 : vector<4x512xf32>
    %cst_5 = arith.constant 0.000000e+00 : f32
    %6 = vector.broadcast %cst_5 : f32 to vector<4x512xf32>
    %7 = arith.subf %6, %5 : vector<4x512xf32>
    %8 = math.exp %7 : vector<4x512xf32>
    %cst_6 = arith.constant 1.000000e+00 : f32
    %9 = vector.broadcast %cst_6 : f32 to vector<4x512xf32>
    %10 = arith.addf %9, %8 : vector<4x512xf32>
    %cst_7 = arith.constant 1.000000e+00 : f32
    %11 = vector.broadcast %cst_7 : f32 to vector<4x512xf32>
    %12 = arith.divf %11, %10 : vector<4x512xf32>
    %c0_8 = arith.constant 0 : index
    %c0_9 = arith.constant 0 : index
    %13 = vector.load %arg4[%c0_8, %c0_9] : memref<4x512xf32, #tpu.memory_space<vmem>>, vector<4x512xf32>
    tpu.vector_store %arg4[%c0_8, %c0_9], %12 {strides = array<i32>} : memref<4x512xf32, #tpu.memory_space<vmem>>, vector<4x512xf32>,
    return
  }
  func.func @transform_0(%arg0: i32) -> (i32, i32) {
    %c0_i32 = arith.constant 0 : i32
    %c0_i32_0 = arith.constant 0 : i32
    %c0_i32_1 = arith.constant 0 : i32
    return %c0_i32, %c0_i32_0 : i32, i32
  }
  func.func @transform_1(%arg0: i32) -> (i32, i32) {
    %c0_i32 = arith.constant 0 : i32
    %c0_i32_0 = arith.constant 0 : i32
    return %c0_i32, %arg0 : i32, i32
  }
  func.func @transform_2(%arg0: i32) -> (i32, i32) {
    %c0_i32 = arith.constant 0 : i32
    %c0_i32_0 = arith.constant 0 : i32
    %c0_i32_1 = arith.constant 0 : i32
    return %c0_i32, %c0_i32_0 : i32, i32
  }
  func.func @transform_3(%arg0: i32) -> (i32, i32) {
    %c0_i32 = arith.constant 0 : i32
    %c0_i32_0 = arith.constant 0 : i32
    return %c0_i32, %arg0 : i32, i32
  }
}

module attributes {stable_mosaic.version = 11 : i64} {
  func.func @_matmul_bias_act_kernel(%arg0: i32, %arg1: memref<8x72xbf16, #tpu.memory_space<vmem>>, %arg2: memref<72x128xbf16, #tpu.memory_space<vmem>>, %arg3: memref<8x1xf32, #tpu.memory_space<vmem>>, %arg4: memref<8x128xf32, #tpu.memory_space<vmem>>) attributes {dimension_semantics = [#tpu.dimension_semantics<parallel>], iteration_bounds = array<i64: 1>, scalar_prefetch = 0 : i64, scratch_operands = 0 : i64, tpu.core_type = #tpu.core_type<tc>, window_params = [{pipeline_mode = #tpu.pipeline_mode<synchronous>, transform_indices = @transform_0, window_bounds = array<i64: 8, 72>}, {transform_indices = @transform_1, window_bounds = array<i64: 72, 128>}, {pipeline_mode = #tpu.pipeline_mode<synchronous>, transform_indices = @transform_2, window_bounds = array<i64: 8, 1>}, {transform_indices = @transform_3, window_bounds = array<i64: 8, 128>}]} {
    %c0 = arith.constant 0 : index
    %c0_0 = arith.constant 0 : index
    %0 = vector.load %arg1[%c0, %c0_0] : memref<8x72xbf16, #tpu.memory_space<vmem>>, vector<8x72xbf16>
    %c0_1 = arith.constant 0 : index
    %c0_2 = arith.constant 0 : index
    %1 = vector.load %arg2[%c0_1, %c0_2] : memref<72x128xbf16, #tpu.memory_space<vmem>>, vector<72x128xbf16>
    %cst = arith.constant dense<0.000000e+00> : vector<8x128xf32>
    %2 = tpu.matmul %0, %1, %cst {dimension_numbers = #tpu.dot_dimension_numbers<[1], [0], [0], [1], [0, 0, 1, 1], [], []>} : vector<8x72xbf16>, vector<72x128xbf16>, vector<8x128xf32> -> vector<8x128xf32>
    %c0_3 = arith.constant 0 : index
    %c0_4 = arith.constant 0 : index
    %3 = vector.load %arg3[%c0_3, %c0_4] : memref<8x1xf32, #tpu.memory_space<vmem>>, vector<8x1xf32>
    %4 = vector.broadcast %3 : vector<8x1xf32> to vector<8x128xf32>
    %5 = arith.addf %2, %4 : vector<8x128xf32>
    %cst_5 = arith.constant 0.000000e+00 : f32
    %6 = vector.broadcast %cst_5 : f32 to vector<8x128xf32>
    %7 = arith.subf %6, %5 : vector<8x128xf32>
    %8 = math.exp %7 : vector<8x128xf32>
    %cst_6 = arith.constant 1.000000e+00 : f32
    %9 = vector.broadcast %cst_6 : f32 to vector<8x128xf32>
    %10 = arith.addf %9, %8 : vector<8x128xf32>
    %cst_7 = arith.constant 1.000000e+00 : f32
    %11 = vector.broadcast %cst_7 : f32 to vector<8x128xf32>
    %12 = arith.divf %11, %10 : vector<8x128xf32>
    %c0_8 = arith.constant 0 : index
    %c0_9 = arith.constant 0 : index
    %13 = vector.load %arg4[%c0_8, %c0_9] : memref<8x128xf32, #tpu.memory_space<vmem>>, vector<8x128xf32>
    tpu.vector_store %arg4[%c0_8, %c0_9], %12 {strides = array<i32>} : memref<8x128xf32, #tpu.memory_space<vmem>>, vector<8x128xf32>,
    return
  }
  func.func @transform_0(%arg0: i32) -> (i32, i32) {
    %c0_i32 = arith.constant 0 : i32
    %c0_i32_0 = arith.constant 0 : i32
    %c0_i32_1 = arith.constant 0 : i32
    return %c0_i32, %c0_i32_0 : i32, i32
  }
  func.func @transform_1(%arg0: i32) -> (i32, i32) {
    %c0_i32 = arith.constant 0 : i32
    %c0_i32_0 = arith.constant 0 : i32
    return %c0_i32, %arg0 : i32, i32
  }
  func.func @transform_2(%arg0: i32) -> (i32, i32) {
    %c0_i32 = arith.constant 0 : i32
    %c0_i32_0 = arith.constant 0 : i32
    %c0_i32_1 = arith.constant 0 : i32
    return %c0_i32, %c0_i32_0 : i32, i32
  }
  func.func @transform_3(%arg0: i32) -> (i32, i32) {
    %c0_i32 = arith.constant 0 : i32
    %c0_i32_0 = arith.constant 0 : i32
    return %c0_i32, %arg0 : i32, i32
  }
}

module attributes {stable_mosaic.version = 11 : i64} {
  func.func @_matmul_bias_act_kernel(%arg0: i32, %arg1: memref<8x144xbf16, #tpu.memory_space<vmem>>, %arg2: memref<144x128xbf16, #tpu.memory_space<vmem>>, %arg3: memref<8x1xf32, #tpu.memory_space<vmem>>, %arg4: memref<8x128xf32, #tpu.memory_space<vmem>>) attributes {dimension_semantics = [#tpu.dimension_semantics<parallel>], iteration_bounds = array<i64: 1>, scalar_prefetch = 0 : i64, scratch_operands = 0 : i64, tpu.core_type = #tpu.core_type<tc>, window_params = [{pipeline_mode = #tpu.pipeline_mode<synchronous>, transform_indices = @transform_0, window_bounds = array<i64: 8, 144>}, {transform_indices = @transform_1, window_bounds = array<i64: 144, 128>}, {pipeline_mode = #tpu.pipeline_mode<synchronous>, transform_indices = @transform_2, window_bounds = array<i64: 8, 1>}, {transform_indices = @transform_3, window_bounds = array<i64: 8, 128>}]} {
    %c0 = arith.constant 0 : index
    %c0_0 = arith.constant 0 : index
    %0 = vector.load %arg1[%c0, %c0_0] : memref<8x144xbf16, #tpu.memory_space<vmem>>, vector<8x144xbf16>
    %c0_1 = arith.constant 0 : index
    %c0_2 = arith.constant 0 : index
    %1 = vector.load %arg2[%c0_1, %c0_2] : memref<144x128xbf16, #tpu.memory_space<vmem>>, vector<144x128xbf16>
    %cst = arith.constant dense<0.000000e+00> : vector<8x128xf32>
    %2 = tpu.matmul %0, %1, %cst {dimension_numbers = #tpu.dot_dimension_numbers<[1], [0], [0], [1], [0, 0, 1, 1], [], []>} : vector<8x144xbf16>, vector<144x128xbf16>, vector<8x128xf32> -> vector<8x128xf32>
    %c0_3 = arith.constant 0 : index
    %c0_4 = arith.constant 0 : index
    %3 = vector.load %arg3[%c0_3, %c0_4] : memref<8x1xf32, #tpu.memory_space<vmem>>, vector<8x1xf32>
    %4 = vector.broadcast %3 : vector<8x1xf32> to vector<8x128xf32>
    %5 = arith.addf %2, %4 : vector<8x128xf32>
    %cst_5 = arith.constant 0.000000e+00 : f32
    %6 = vector.broadcast %cst_5 : f32 to vector<8x128xf32>
    %7 = arith.maximumf %5, %6 : vector<8x128xf32>
    %c0_6 = arith.constant 0 : index
    %c0_7 = arith.constant 0 : index
    %8 = vector.load %arg4[%c0_6, %c0_7] : memref<8x128xf32, #tpu.memory_space<vmem>>, vector<8x128xf32>
    tpu.vector_store %arg4[%c0_6, %c0_7], %7 {strides = array<i32>} : memref<8x128xf32, #tpu.memory_space<vmem>>, vector<8x128xf32>,
    return
  }
  func.func @transform_0(%arg0: i32) -> (i32, i32) {
    %c0_i32 = arith.constant 0 : i32
    %c0_i32_0 = arith.constant 0 : i32
    %c0_i32_1 = arith.constant 0 : i32
    return %c0_i32, %c0_i32_0 : i32, i32
  }
  func.func @transform_1(%arg0: i32) -> (i32, i32) {
    %c0_i32 = arith.constant 0 : i32
    %c0_i32_0 = arith.constant 0 : i32
    return %c0_i32, %arg0 : i32, i32
  }
  func.func @transform_2(%arg0: i32) -> (i32, i32) {
    %c0_i32 = arith.constant 0 : i32
    %c0_i32_0 = arith.constant 0 : i32
    %c0_i32_1 = arith.constant 0 : i32
    return %c0_i32, %c0_i32_0 : i32, i32
  }
  func.func @transform_3(%arg0: i32) -> (i32, i32) {
    %c0_i32 = arith.constant 0 : i32
    %c0_i32_0 = arith.constant 0 : i32
    return %c0_i32, %arg0 : i32, i32
  }
}

module attributes {stable_mosaic.version = 11 : i64} {
  func.func @_matmul_bias_act_kernel(%arg0: i32, %arg1: memref<16x8xbf16, #tpu.memory_space<vmem>>, %arg2: memref<8x128xbf16, #tpu.memory_space<vmem>>, %arg3: memref<16x1xf32, #tpu.memory_space<vmem>>, %arg4: memref<16x128xf32, #tpu.memory_space<vmem>>) attributes {dimension_semantics = [#tpu.dimension_semantics<parallel>], iteration_bounds = array<i64: 1>, scalar_prefetch = 0 : i64, scratch_operands = 0 : i64, tpu.core_type = #tpu.core_type<tc>, window_params = [{pipeline_mode = #tpu.pipeline_mode<synchronous>, transform_indices = @transform_0, window_bounds = array<i64: 16, 8>}, {transform_indices = @transform_1, window_bounds = array<i64: 8, 128>}, {pipeline_mode = #tpu.pipeline_mode<synchronous>, transform_indices = @transform_2, window_bounds = array<i64: 16, 1>}, {transform_indices = @transform_3, window_bounds = array<i64: 16, 128>}]} {
    %c0 = arith.constant 0 : index
    %c0_0 = arith.constant 0 : index
    %0 = vector.load %arg1[%c0, %c0_0] : memref<16x8xbf16, #tpu.memory_space<vmem>>, vector<16x8xbf16>
    %c0_1 = arith.constant 0 : index
    %c0_2 = arith.constant 0 : index
    %1 = vector.load %arg2[%c0_1, %c0_2] : memref<8x128xbf16, #tpu.memory_space<vmem>>, vector<8x128xbf16>
    %cst = arith.constant dense<0.000000e+00> : vector<16x128xf32>
    %2 = tpu.matmul %0, %1, %cst {dimension_numbers = #tpu.dot_dimension_numbers<[1], [0], [0], [1], [0, 0, 1, 1], [], []>} : vector<16x8xbf16>, vector<8x128xbf16>, vector<16x128xf32> -> vector<16x128xf32>
    %c0_3 = arith.constant 0 : index
    %c0_4 = arith.constant 0 : index
    %3 = vector.load %arg3[%c0_3, %c0_4] : memref<16x1xf32, #tpu.memory_space<vmem>>, vector<16x1xf32>
    %4 = vector.broadcast %3 : vector<16x1xf32> to vector<16x128xf32>
    %5 = arith.addf %2, %4 : vector<16x128xf32>
    %c0_5 = arith.constant 0 : index
    %c0_6 = arith.constant 0 : index
    %6 = vector.load %arg4[%c0_5, %c0_6] : memref<16x128xf32, #tpu.memory_space<vmem>>, vector<16x128xf32>
    tpu.vector_store %arg4[%c0_5, %c0_6], %5 {strides = array<i32>} : memref<16x128xf32, #tpu.memory_space<vmem>>, vector<16x128xf32>,
    return
  }
  func.func @transform_0(%arg0: i32) -> (i32, i32) {
    %c0_i32 = arith.constant 0 : i32
    %c0_i32_0 = arith.constant 0 : i32
    %c0_i32_1 = arith.constant 0 : i32
    return %c0_i32, %c0_i32_0 : i32, i32
  }
  func.func @transform_1(%arg0: i32) -> (i32, i32) {
    %c0_i32 = arith.constant 0 : i32
    %c0_i32_0 = arith.constant 0 : i32
    return %c0_i32, %arg0 : i32, i32
  }
  func.func @transform_2(%arg0: i32) -> (i32, i32) {
    %c0_i32 = arith.constant 0 : i32
    %c0_i32_0 = arith.constant 0 : i32
    %c0_i32_1 = arith.constant 0 : i32
    return %c0_i32, %c0_i32_0 : i32, i32
  }
  func.func @transform_3(%arg0: i32) -> (i32, i32) {
    %c0_i32 = arith.constant 0 : i32
    %c0_i32_0 = arith.constant 0 : i32
    return %c0_i32, %arg0 : i32, i32
  }
}

module attributes {stable_mosaic.version = 11 : i64} {
  func.func @_matmul_bias_act_kernel(%arg0: i32, %arg1: memref<8x72xbf16, #tpu.memory_space<vmem>>, %arg2: memref<72x128xbf16, #tpu.memory_space<vmem>>, %arg3: memref<8x1xf32, #tpu.memory_space<vmem>>, %arg4: memref<8x128xf32, #tpu.memory_space<vmem>>) attributes {dimension_semantics = [#tpu.dimension_semantics<parallel>], iteration_bounds = array<i64: 1>, scalar_prefetch = 0 : i64, scratch_operands = 0 : i64, tpu.core_type = #tpu.core_type<tc>, window_params = [{pipeline_mode = #tpu.pipeline_mode<synchronous>, transform_indices = @transform_0, window_bounds = array<i64: 8, 72>}, {transform_indices = @transform_1, window_bounds = array<i64: 72, 128>}, {pipeline_mode = #tpu.pipeline_mode<synchronous>, transform_indices = @transform_2, window_bounds = array<i64: 8, 1>}, {transform_indices = @transform_3, window_bounds = array<i64: 8, 128>}]} {
    %c0 = arith.constant 0 : index
    %c0_0 = arith.constant 0 : index
    %0 = vector.load %arg1[%c0, %c0_0] : memref<8x72xbf16, #tpu.memory_space<vmem>>, vector<8x72xbf16>
    %c0_1 = arith.constant 0 : index
    %c0_2 = arith.constant 0 : index
    %1 = vector.load %arg2[%c0_1, %c0_2] : memref<72x128xbf16, #tpu.memory_space<vmem>>, vector<72x128xbf16>
    %cst = arith.constant dense<0.000000e+00> : vector<8x128xf32>
    %2 = tpu.matmul %0, %1, %cst {dimension_numbers = #tpu.dot_dimension_numbers<[1], [0], [0], [1], [0, 0, 1, 1], [], []>} : vector<8x72xbf16>, vector<72x128xbf16>, vector<8x128xf32> -> vector<8x128xf32>
    %c0_3 = arith.constant 0 : index
    %c0_4 = arith.constant 0 : index
    %3 = vector.load %arg3[%c0_3, %c0_4] : memref<8x1xf32, #tpu.memory_space<vmem>>, vector<8x1xf32>
    %4 = vector.broadcast %3 : vector<8x1xf32> to vector<8x128xf32>
    %5 = arith.addf %2, %4 : vector<8x128xf32>
    %cst_5 = arith.constant 0.000000e+00 : f32
    %6 = vector.broadcast %cst_5 : f32 to vector<8x128xf32>
    %7 = arith.maximumf %5, %6 : vector<8x128xf32>
    %c0_6 = arith.constant 0 : index
    %c0_7 = arith.constant 0 : index
    %8 = vector.load %arg4[%c0_6, %c0_7] : memref<8x128xf32, #tpu.memory_space<vmem>>, vector<8x128xf32>
    tpu.vector_store %arg4[%c0_6, %c0_7], %7 {strides = array<i32>} : memref<8x128xf32, #tpu.memory_space<vmem>>, vector<8x128xf32>,
    return
  }
  func.func @transform_0(%arg0: i32) -> (i32, i32) {
    %c0_i32 = arith.constant 0 : i32
    %c0_i32_0 = arith.constant 0 : i32
    %c0_i32_1 = arith.constant 0 : i32
    return %c0_i32, %c0_i32_0 : i32, i32
  }
  func.func @transform_1(%arg0: i32) -> (i32, i32) {
    %c0_i32 = arith.constant 0 : i32
    %c0_i32_0 = arith.constant 0 : i32
    return %c0_i32, %arg0 : i32, i32
  }
  func.func @transform_2(%arg0: i32) -> (i32, i32) {
    %c0_i32 = arith.constant 0 : i32
    %c0_i32_0 = arith.constant 0 : i32
    %c0_i32_1 = arith.constant 0 : i32
    return %c0_i32, %c0_i32_0 : i32, i32
  }
  func.func @transform_3(%arg0: i32) -> (i32, i32) {
    %c0_i32 = arith.constant 0 : i32
    %c0_i32_0 = arith.constant 0 : i32
    return %c0_i32, %arg0 : i32, i32
  }
}

module attributes {stable_mosaic.version = 11 : i64} {
  func.func @_matmul_bias_act_kernel(%arg0: i32, %arg1: memref<4x72xbf16, #tpu.memory_space<vmem>>, %arg2: memref<72x512xbf16, #tpu.memory_space<vmem>>, %arg3: memref<4x1xf32, #tpu.memory_space<vmem>>, %arg4: memref<4x512xf32, #tpu.memory_space<vmem>>) attributes {dimension_semantics = [#tpu.dimension_semantics<parallel>], iteration_bounds = array<i64: 1>, scalar_prefetch = 0 : i64, scratch_operands = 0 : i64, tpu.core_type = #tpu.core_type<tc>, window_params = [{pipeline_mode = #tpu.pipeline_mode<synchronous>, transform_indices = @transform_0, window_bounds = array<i64: 4, 72>}, {transform_indices = @transform_1, window_bounds = array<i64: 72, 512>}, {pipeline_mode = #tpu.pipeline_mode<synchronous>, transform_indices = @transform_2, window_bounds = array<i64: 4, 1>}, {transform_indices = @transform_3, window_bounds = array<i64: 4, 512>}]} {
    %c0 = arith.constant 0 : index
    %c0_0 = arith.constant 0 : index
    %0 = vector.load %arg1[%c0, %c0_0] : memref<4x72xbf16, #tpu.memory_space<vmem>>, vector<4x72xbf16>
    %c0_1 = arith.constant 0 : index
    %c0_2 = arith.constant 0 : index
    %1 = vector.load %arg2[%c0_1, %c0_2] : memref<72x512xbf16, #tpu.memory_space<vmem>>, vector<72x512xbf16>
    %cst = arith.constant dense<0.000000e+00> : vector<4x512xf32>
    %2 = tpu.matmul %0, %1, %cst {dimension_numbers = #tpu.dot_dimension_numbers<[1], [0], [0], [1], [0, 0, 1, 1], [], []>} : vector<4x72xbf16>, vector<72x512xbf16>, vector<4x512xf32> -> vector<4x512xf32>
    %c0_3 = arith.constant 0 : index
    %c0_4 = arith.constant 0 : index
    %3 = vector.load %arg3[%c0_3, %c0_4] : memref<4x1xf32, #tpu.memory_space<vmem>>, vector<4x1xf32>
    %4 = vector.broadcast %3 : vector<4x1xf32> to vector<4x512xf32>
    %5 = arith.addf %2, %4 : vector<4x512xf32>
    %cst_5 = arith.constant 0.000000e+00 : f32
    %6 = vector.broadcast %cst_5 : f32 to vector<4x512xf32>
    %7 = arith.maximumf %5, %6 : vector<4x512xf32>
    %c0_6 = arith.constant 0 : index
    %c0_7 = arith.constant 0 : index
    %8 = vector.load %arg4[%c0_6, %c0_7] : memref<4x512xf32, #tpu.memory_space<vmem>>, vector<4x512xf32>
    tpu.vector_store %arg4[%c0_6, %c0_7], %7 {strides = array<i32>} : memref<4x512xf32, #tpu.memory_space<vmem>>, vector<4x512xf32>,
    return
  }
  func.func @transform_0(%arg0: i32) -> (i32, i32) {
    %c0_i32 = arith.constant 0 : i32
    %c0_i32_0 = arith.constant 0 : i32
    %c0_i32_1 = arith.constant 0 : i32
    return %c0_i32, %c0_i32_0 : i32, i32
  }
  func.func @transform_1(%arg0: i32) -> (i32, i32) {
    %c0_i32 = arith.constant 0 : i32
    %c0_i32_0 = arith.constant 0 : i32
    return %c0_i32, %arg0 : i32, i32
  }
  func.func @transform_2(%arg0: i32) -> (i32, i32) {
    %c0_i32 = arith.constant 0 : i32
    %c0_i32_0 = arith.constant 0 : i32
    %c0_i32_1 = arith.constant 0 : i32
    return %c0_i32, %c0_i32_0 : i32, i32
  }
  func.func @transform_3(%arg0: i32) -> (i32, i32) {
    %c0_i32 = arith.constant 0 : i32
    %c0_i32_0 = arith.constant 0 : i32
    return %c0_i32, %arg0 : i32, i32
  }
}

module attributes {stable_mosaic.version = 11 : i64} {
  func.func @_matmul_bias_act_kernel(%arg0: i32, %arg1: memref<4x36xbf16, #tpu.memory_space<vmem>>, %arg2: memref<36x512xbf16, #tpu.memory_space<vmem>>, %arg3: memref<4x1xf32, #tpu.memory_space<vmem>>, %arg4: memref<4x512xf32, #tpu.memory_space<vmem>>) attributes {dimension_semantics = [#tpu.dimension_semantics<parallel>], iteration_bounds = array<i64: 1>, scalar_prefetch = 0 : i64, scratch_operands = 0 : i64, tpu.core_type = #tpu.core_type<tc>, window_params = [{pipeline_mode = #tpu.pipeline_mode<synchronous>, transform_indices = @transform_0, window_bounds = array<i64: 4, 36>}, {transform_indices = @transform_1, window_bounds = array<i64: 36, 512>}, {pipeline_mode = #tpu.pipeline_mode<synchronous>, transform_indices = @transform_2, window_bounds = array<i64: 4, 1>}, {transform_indices = @transform_3, window_bounds = array<i64: 4, 512>}]} {
    %c0 = arith.constant 0 : index
    %c0_0 = arith.constant 0 : index
    %0 = vector.load %arg1[%c0, %c0_0] : memref<4x36xbf16, #tpu.memory_space<vmem>>, vector<4x36xbf16>
    %c0_1 = arith.constant 0 : index
    %c0_2 = arith.constant 0 : index
    %1 = vector.load %arg2[%c0_1, %c0_2] : memref<36x512xbf16, #tpu.memory_space<vmem>>, vector<36x512xbf16>
    %cst = arith.constant dense<0.000000e+00> : vector<4x512xf32>
    %2 = tpu.matmul %0, %1, %cst {dimension_numbers = #tpu.dot_dimension_numbers<[1], [0], [0], [1], [0, 0, 1, 1], [], []>} : vector<4x36xbf16>, vector<36x512xbf16>, vector<4x512xf32> -> vector<4x512xf32>
    %c0_3 = arith.constant 0 : index
    %c0_4 = arith.constant 0 : index
    %3 = vector.load %arg3[%c0_3, %c0_4] : memref<4x1xf32, #tpu.memory_space<vmem>>, vector<4x1xf32>
    %4 = vector.broadcast %3 : vector<4x1xf32> to vector<4x512xf32>
    %5 = arith.addf %2, %4 : vector<4x512xf32>
    %cst_5 = arith.constant 0.000000e+00 : f32
    %6 = vector.broadcast %cst_5 : f32 to vector<4x512xf32>
    %7 = arith.maximumf %5, %6 : vector<4x512xf32>
    %c0_6 = arith.constant 0 : index
    %c0_7 = arith.constant 0 : index
    %8 = vector.load %arg4[%c0_6, %c0_7] : memref<4x512xf32, #tpu.memory_space<vmem>>, vector<4x512xf32>
    tpu.vector_store %arg4[%c0_6, %c0_7], %7 {strides = array<i32>} : memref<4x512xf32, #tpu.memory_space<vmem>>, vector<4x512xf32>,
    return
  }
  func.func @transform_0(%arg0: i32) -> (i32, i32) {
    %c0_i32 = arith.constant 0 : i32
    %c0_i32_0 = arith.constant 0 : i32
    %c0_i32_1 = arith.constant 0 : i32
    return %c0_i32, %c0_i32_0 : i32, i32
  }
  func.func @transform_1(%arg0: i32) -> (i32, i32) {
    %c0_i32 = arith.constant 0 : i32
    %c0_i32_0 = arith.constant 0 : i32
    return %c0_i32, %arg0 : i32, i32
  }
  func.func @transform_2(%arg0: i32) -> (i32, i32) {
    %c0_i32 = arith.constant 0 : i32
    %c0_i32_0 = arith.constant 0 : i32
    %c0_i32_1 = arith.constant 0 : i32
    return %c0_i32, %c0_i32_0 : i32, i32
  }
  func.func @transform_3(%arg0: i32) -> (i32, i32) {
    %c0_i32 = arith.constant 0 : i32
    %c0_i32_0 = arith.constant 0 : i32
    return %c0_i32, %arg0 : i32, i32
  }
}

module attributes {stable_mosaic.version = 11 : i64} {
  func.func @_matmul_bias_act_kernel(%arg0: i32, %arg1: memref<3x4xbf16, #tpu.memory_space<vmem>>, %arg2: memref<4x512xbf16, #tpu.memory_space<vmem>>, %arg3: memref<3x1xf32, #tpu.memory_space<vmem>>, %arg4: memref<3x512xf32, #tpu.memory_space<vmem>>) attributes {dimension_semantics = [#tpu.dimension_semantics<parallel>], iteration_bounds = array<i64: 1>, scalar_prefetch = 0 : i64, scratch_operands = 0 : i64, tpu.core_type = #tpu.core_type<tc>, window_params = [{pipeline_mode = #tpu.pipeline_mode<synchronous>, transform_indices = @transform_0, window_bounds = array<i64: 3, 4>}, {transform_indices = @transform_1, window_bounds = array<i64: 4, 512>}, {pipeline_mode = #tpu.pipeline_mode<synchronous>, transform_indices = @transform_2, window_bounds = array<i64: 3, 1>}, {transform_indices = @transform_3, window_bounds = array<i64: 3, 512>}]} {
    %c0 = arith.constant 0 : index
    %c0_0 = arith.constant 0 : index
    %0 = vector.load %arg1[%c0, %c0_0] : memref<3x4xbf16, #tpu.memory_space<vmem>>, vector<3x4xbf16>
    %c0_1 = arith.constant 0 : index
    %c0_2 = arith.constant 0 : index
    %1 = vector.load %arg2[%c0_1, %c0_2] : memref<4x512xbf16, #tpu.memory_space<vmem>>, vector<4x512xbf16>
    %cst = arith.constant dense<0.000000e+00> : vector<3x512xf32>
    %2 = tpu.matmul %0, %1, %cst {dimension_numbers = #tpu.dot_dimension_numbers<[1], [0], [0], [1], [0, 0, 1, 1], [], []>} : vector<3x4xbf16>, vector<4x512xbf16>, vector<3x512xf32> -> vector<3x512xf32>
    %c0_3 = arith.constant 0 : index
    %c0_4 = arith.constant 0 : index
    %3 = vector.load %arg3[%c0_3, %c0_4] : memref<3x1xf32, #tpu.memory_space<vmem>>, vector<3x1xf32>
    %4 = vector.broadcast %3 : vector<3x1xf32> to vector<3x512xf32>
    %5 = arith.addf %2, %4 : vector<3x512xf32>
    %c0_5 = arith.constant 0 : index
    %c0_6 = arith.constant 0 : index
    %6 = vector.load %arg4[%c0_5, %c0_6] : memref<3x512xf32, #tpu.memory_space<vmem>>, vector<3x512xf32>
    tpu.vector_store %arg4[%c0_5, %c0_6], %5 {strides = array<i32>} : memref<3x512xf32, #tpu.memory_space<vmem>>, vector<3x512xf32>,
    return
  }
  func.func @transform_0(%arg0: i32) -> (i32, i32) {
    %c0_i32 = arith.constant 0 : i32
    %c0_i32_0 = arith.constant 0 : i32
    %c0_i32_1 = arith.constant 0 : i32
    return %c0_i32, %c0_i32_0 : i32, i32
  }
  func.func @transform_1(%arg0: i32) -> (i32, i32) {
    %c0_i32 = arith.constant 0 : i32
    %c0_i32_0 = arith.constant 0 : i32
    return %c0_i32, %arg0 : i32, i32
  }
  func.func @transform_2(%arg0: i32) -> (i32, i32) {
    %c0_i32 = arith.constant 0 : i32
    %c0_i32_0 = arith.constant 0 : i32
    %c0_i32_1 = arith.constant 0 : i32
    return %c0_i32, %c0_i32_0 : i32, i32
  }
  func.func @transform_3(%arg0: i32) -> (i32, i32) {
    %c0_i32 = arith.constant 0 : i32
    %c0_i32_0 = arith.constant 0 : i32
    return %c0_i32, %arg0 : i32, i32
  }
}

</mosaic_0001>

<llo_original>
// kernel: _lambda_.13
$region0: #{_lambda_.13}
  #allocation0 [shape = 'u32[]', space=smem, size = 0x4, offset = 0x4, fixed_abs, tag = 'smem constant byte address 0x4 - core index']
  #allocation1 [shape = 'u32[144,128]{1,0:T(1,128)}', space=vmem, size = 0x12000, scoped, tag = 'internal scratch']
  %s0 = inlined_call_operand.hbm [shape: bf16[32,16], index: 0, kind: input, shape index: {}]
  %s1 = inlined_call_operand.vmem [shape: bf16[16,128], index: 1, kind: input, shape index: {}]
  %s2 = inlined_call_operand.vmem [shape: f32[32,1], index: 2, kind: input, shape index: {}]
  %s3 = inlined_call_operand.vmem [shape: f32[32,128], index: 3, kind: output, shape index: {}]
  %s4 = sld [smem:[#allocation0]]
  $region26: #{_lambda_.13} parent=0
    _
  %s6 = ssub.s32 1, %s4
  %s7 = scalar_select 0, %s6, %s4
  $region1: #{_lambda_.13} parent=0
    #allocation2 [shape = 'u8[8192]{0}', space=vmem, size = 0x2000, scoped, tag = 'input window, operand 0, single buffered']
    #allocation3 [shape = 's32[1]{0}', space=sflag, size = 0x4, scoped, tag = 'scoped memory for _lambda_.13']
    %8 = vsyncpa [#allocation3], 0
    // Predicated region
    $region2: #{_lambda_.13} parent=1 // pred_check
      _
    $region3: #{_lambda_.13} parent=1 // pred_check_branch
      %10 = sbr.rel (0) target = $region5
    $region4: #{_lambda_.13} parent=1 // pred_region
      %s12 = ssub.s32 256, 256
      %13 = vsyncadd [#allocation3], %s12
      %s14 = sshll.u32 [#allocation2], 4
      %s15 = int_to_ptr.vmem [resolvable:$true] %s14
      %20 = dma.hbm_to_vmem [thread:$0]  %s0, 256, %s15, [#allocation3], 64, 64, 4
    $region5: #{_lambda_.13} parent=1 // pred_fallthru
      _
    // Predicated region
    $region6: #{_lambda_.13} parent=1 // pred_check
      _
    $region7: #{_lambda_.13} parent=1 // pred_check_branch
      %22 = sbr.rel (0) target = $region9
    $region8: #{_lambda_.13} parent=1 // pred_region
      _
    $region9: #{_lambda_.13} parent=1 // pred_fallthru
      _
    // Predicated region
    $region10: #{_lambda_.13} parent=1 // pred_check
      _
    $region11: #{_lambda_.13} parent=1 // pred_check_branch
      %24 = sbr.rel (0) target = $region13
    $region12: #{_lambda_.13} parent=1 // pred_region
      _
    $region13: #{_lambda_.13} parent=1 // pred_fallthru
      _
    // Predicated region
    $region14: #{_lambda_.13} parent=1 // pred_check
      _
    $region15: #{_lambda_.13} parent=1 // pred_check_branch
      %26 = sbr.rel (0) target = $region17
    $region16: #{_lambda_.13} parent=1 // pred_region
      %27 = dma.done [#allocation3], 256
    $region17: #{_lambda_.13} parent=1 // pred_fallthru
      _
    %v29 = vld [vmem:[#allocation2] sm:$0xf]
    %v30 = vld [vmem:[#allocation2 + $0x4] sm:$0xf]
    %v31 = vld [vmem:[#allocation2 + $0x8] sm:$0xf]
    %v32 = vld [vmem:[#allocation2 + $0xc] sm:$0xf]
    %v33 = vld [vmem:[%s1] sm:$0xf]
    %v34 = vld [vmem:[%s1 + $0x4] sm:$0xf]
    %v35 = vld [vmem:[%s2] sm:$0xff]
    %v36 = vld [vmem:[%s2 + $0x8] sm:$0xff]
    %v37 = vld [vmem:[%s2 + $0x10] sm:$0xff]
    %v38 = vld [vmem:[%s2 + $0x18] sm:$0xff]
    %40 = vset.pattern.permute.xlu0 0
    %41 = vperm.xlu0 %40, %v35
    %v42 = vpop.permute.xlu0 %41
    %45 = vset.pattern.permute.xlu0 0
    %46 = vperm.xlu0 %45, %v36
    %v47 = vpop.permute.xlu0 %46
    %50 = vset.pattern.permute.xlu0 0
    %51 = vperm.xlu0 %50, %v37
    %v52 = vpop.permute.xlu0 %51
    %55 = vset.pattern.permute.xlu0 0
    %56 = vperm.xlu0 %55, %v38
    %v57 = vpop.permute.xlu0 %56
    %v63 = vunpack.c.l.b16 %v29
    %v64 = vunpack.c.l.b16 %v30
    %v65 = vunpack.c.l.b16 %v31
    %v66 = vunpack.c.l.b16 %v32
    %v67 = vpack.c.b16 %v64, %v63
    %v68 = vpack.c.b16 %v66, %v65
    %v71 = vunpack.c.l.b16 %v33
    %v72 = vunpack.c.l.b16 %v34
    %v73 = vpack.c.b16 %v72, %v71
    %vm75 = vcmask 130048
    %v77 = vsel %vm75, %v67, 0
    %v80 = vsel %vm75, %v68, 0
    %82 = vmatprep.subr.bf16.mxu0 0
    %83 = vmatpush1.bf16.msra.mxu0 %v73
    %84 = vmatprep.subr.bf16.mxu0 0
    %85 = vmatpush1.bf16.msra.mxu0 0
    %86 = vmatprep.subr.bf16.mxu0 0
    %87 = vmatpush1.bf16.msra.mxu0 0
    %88 = vmatprep.subr.bf16.mxu0 0
    %89 = vmatpush1.bf16.msra.mxu0 0
    %90 = vmatprep.subr.bf16.mxu0 0
    %91 = vmatpush1.bf16.msra.mxu0 0
    %92 = vmatprep.subr.bf16.mxu0 0
    %93 = vmatpush1.bf16.msra.mxu0 0
    %94 = vmatprep.subr.bf16.mxu0 0
    %95 = vmatpush1.bf16.msra.mxu0 0
    %96 = vmatprep.subr.bf16.mxu0 0
    %97 = vmatpush1.bf16.msra.mxu0 0
    %98 = vmatprep.subr.bf16.mxu0 0
    %99 = vmatpush1.bf16.msra.mxu0 0
    %100 = vmatprep.subr.bf16.mxu0 0
    %101 = vmatpush1.bf16.msra.mxu0 0
    %102 = vmatprep.subr.bf16.mxu0 0
    %103 = vmatpush1.bf16.msra.mxu0 0
    %104 = vmatprep.subr.bf16.mxu0 0
    %105 = vmatpush1.bf16.msra.mxu0 0
    %106 = vmatprep.subr.bf16.mxu0 0
    %107 = vmatpush1.bf16.msra.mxu0 0
    %108 = vmatprep.subr.bf16.mxu0 0
    %109 = vmatpush1.bf16.msra.mxu0 0
    %110 = vmatprep.subr.bf16.mxu0 0
    %111 = vmatpush1.bf16.msra.mxu0 0
    %112 = vmatprep.subr.bf16.mxu0 0
    %113 = vmatpush1.bf16.msra.mxu0 0
    %114 = vmatprep.mubr.bf16.mxu0 0
    %115 = vmatmul.mubr.bf16.gmra.mrb[0].mxu0 %v77
    %v116 = vpop.f32.mrb[0].mxu0
    %v117 = vadd.f32 %v42, %v116
    %v118 = vpop.f32.mrb[0].mxu0
    %v119 = vpop.f32.mrb[0].mxu0
    %v120 = vadd.f32 %v47, %v119
    %v121 = vpop.f32.mrb[0].mxu0
    %122 = vmatprep.mubr.bf16.mxu0 0
    %123 = vmatmul.mubr.bf16.gmra.mrb[0].mxu0 %v80
    %v124 = vpop.f32.mrb[0].mxu0
    %v125 = vadd.f32 %v52, %v124
    %v126 = vpop.f32.mrb[0].mxu0
    %v127 = vpop.f32.mrb[0].mxu0
    %v128 = vadd.f32 %v57, %v127
    %v129 = vpop.f32.mrb[0].mxu0
    %130 = vdwg.mxu0
    %131 = vst [vmem:[%s3] sm:$0xff] %v117
    %132 = vst [vmem:[%s3 + $0x8] sm:$0xff] %v120
    %133 = vst [vmem:[%s3 + $0x10] sm:$0xff] %v125
    %134 = vst [vmem:[%s3 + $0x18] sm:$0xff] %v128
    // Predicated region
    $region18: #{_lambda_.13} parent=1 // pred_check
      _
    $region19: #{_lambda_.13} parent=1 // pred_check_branch
      %136 = sbr.rel (0) target = $region21
    $region20: #{_lambda_.13} parent=1 // pred_region
      _
    $region21: #{_lambda_.13} parent=1 // pred_fallthru
      _
    // Predicated region
    $region22: #{_lambda_.13} parent=1 // pred_check
      _
    $region23: #{_lambda_.13} parent=1 // pred_check_branch
      %138 = sbr.rel (0) target = $region25
    $region24: #{_lambda_.13} parent=1 // pred_region
      _
    $region25: #{_lambda_.13} parent=1 // pred_fallthru
      _
    %139 = vsyncpa [#allocation3], 1

// kernel: _lambda_.11
$region0: #{_lambda_.11}
  #allocation0 [shape = 'u32[]', space=smem, size = 0x4, offset = 0x4, fixed_abs, tag = 'smem constant byte address 0x4 - core index']
  #allocation1 [shape = 'u32[144,128]{1,0:T(1,128)}', space=vmem, size = 0x12000, scoped, tag = 'internal scratch']
  %s0 = inlined_call_operand.hbm [shape: bf16[8,9], index: 0, kind: input, shape index: {}]
  %s1 = inlined_call_operand.vmem [shape: bf16[9,128], index: 1, kind: input, shape index: {}]
  %s2 = inlined_call_operand.hbm [shape: f32[8,1], index: 2, kind: input, shape index: {}]
  %s3 = inlined_call_operand.vmem [shape: f32[8,128], index: 3, kind: output, shape index: {}]
  %s4 = sld [smem:[#allocation0]]
  $region30: #{_lambda_.11} parent=0
    _
  %s6 = ssub.s32 1, %s4
  %s7 = scalar_select 0, %s6, %s4
  $region1: #{_lambda_.11} parent=0
    #allocation2 [shape = 'u8[2048]{0}', space=vmem, size = 0x800, scoped, tag = 'input window, operand 0, single buffered']
    #allocation3 [shape = 's32[1]{0}', space=sflag, size = 0x4, scoped, tag = 'scoped memory for _lambda_.11']
    #allocation4 [shape = 'u8[4096]{0}', space=vmem, size = 0x1000, scoped, tag = 'input window, operand 2, single buffered']
    #allocation5 [shape = 's32[1]{0}', space=sflag, size = 0x4, scoped, tag = 'scoped memory for _lambda_.11']
    %8 = vsyncpa [#allocation3], 0
    %9 = vsyncpa [#allocation5], 0
    // Predicated region
    $region2: #{_lambda_.11} parent=1 // pred_check
      _
    $region3: #{_lambda_.11} parent=1 // pred_check_branch
      %11 = sbr.rel (0) target = $region5
    $region4: #{_lambda_.11} parent=1 // pred_region
      %s13 = ssub.s32 64, 64
      %14 = vsyncadd [#allocation3], %s13
      %s16 = sshll.u32 [#allocation2], 4
      %s17 = int_to_ptr.vmem [resolvable:$true] %s16
      %19 = dma.hbm_to_vmem [thread:$0]  %s0, 64, %s17, [#allocation3]
    $region5: #{_lambda_.11} parent=1 // pred_fallthru
      _
    // Predicated region
    $region6: #{_lambda_.11} parent=1 // pred_check
      _
    $region7: #{_lambda_.11} parent=1 // pred_check_branch
      %21 = sbr.rel (0) target = $region9
    $region8: #{_lambda_.11} parent=1 // pred_region
      _
    $region9: #{_lambda_.11} parent=1 // pred_fallthru
      _
    // Predicated region
    $region10: #{_lambda_.11} parent=1 // pred_check
      _
    $region11: #{_lambda_.11} parent=1 // pred_check_branch
      %23 = sbr.rel (0) target = $region13
    $region12: #{_lambda_.11} parent=1 // pred_region
      %s25 = ssub.s32 128, 128
      %26 = vsyncadd [#allocation5], %s25
      %s28 = sshll.u32 [#allocation4], 4
      %s29 = int_to_ptr.vmem [resolvable:$true] %s28
      %31 = dma.hbm_to_vmem [thread:$0]  %s2, 128, %s29, [#allocation5]
    $region13: #{_lambda_.11} parent=1 // pred_fallthru
      _
    // Predicated region
    $region14: #{_lambda_.11} parent=1 // pred_check
      _
    $region15: #{_lambda_.11} parent=1 // pred_check_branch
      %33 = sbr.rel (0) target = $region17
    $region16: #{_lambda_.11} parent=1 // pred_region
      %34 = dma.done [#allocation3], 64
    $region17: #{_lambda_.11} parent=1 // pred_fallthru
      _
    // Predicated region
    $region18: #{_lambda_.11} parent=1 // pred_check
      _
    $region19: #{_lambda_.11} parent=1 // pred_check_branch
      %36 = sbr.rel (0) target = $region21
    $region20: #{_lambda_.11} parent=1 // pred_region
      %37 = dma.done [#allocation5], 128
    $region21: #{_lambda_.11} parent=1 // pred_fallthru
      _
    %v39 = vld [vmem:[#allocation2] sm:$0xf]
    %v40 = vld [vmem:[%s1] sm:$0xf]
    %v41 = vld [vmem:[%s1 + $0x4] sm:$0x1]
    %v42 = vld [vmem:[#allocation4] sm:$0xff]
    %44 = vset.pattern.permute.xlu0 0
    %45 = vperm.xlu0 %44, %v42
    %v46 = vpop.permute.xlu0 %45
    %v50 = vunpack.c.l.b16 %v40
    %v51 = vunpack.c.l.b16 %v41
    %v52 = vpack.c.b16 %v51, %v50
    %vm53 = vcmask 72704
    %v55 = vsel %vm53, %v39, 0
    %vm57 = vcmask 1043456
    %vm58 = vcmask 1044480
    %v59 = vsel %vm57, 4294967295, 65535
    %v60 = vsel %vm58, %v59, 0
    %v62 = vand.u32 %v52, %v60
    %64 = vmatprep.subr.bf16.mxu0 0
    %65 = vmatpush1.bf16.msra.mxu0 %v62
    %66 = vmatprep.subr.bf16.mxu0 0
    %67 = vmatpush1.bf16.msra.mxu0 0
    %68 = vmatprep.subr.bf16.mxu0 0
    %69 = vmatpush1.bf16.msra.mxu0 0
    %70 = vmatprep.subr.bf16.mxu0 0
    %71 = vmatpush1.bf16.msra.mxu0 0
    %72 = vmatprep.subr.bf16.mxu0 0
    %73 = vmatpush1.bf16.msra.mxu0 0
    %74 = vmatprep.subr.bf16.mxu0 0
    %75 = vmatpush1.bf16.msra.mxu0 0
    %76 = vmatprep.subr.bf16.mxu0 0
    %77 = vmatpush1.bf16.msra.mxu0 0
    %78 = vmatprep.subr.bf16.mxu0 0
    %79 = vmatpush1.bf16.msra.mxu0 0
    %80 = vmatprep.subr.bf16.mxu0 0
    %81 = vmatpush1.bf16.msra.mxu0 0
    %82 = vmatprep.subr.bf16.mxu0 0
    %83 = vmatpush1.bf16.msra.mxu0 0
    %84 = vmatprep.subr.bf16.mxu0 0
    %85 = vmatpush1.bf16.msra.mxu0 0
    %86 = vmatprep.subr.bf16.mxu0 0
    %87 = vmatpush1.bf16.msra.mxu0 0
    %88 = vmatprep.subr.bf16.mxu0 0
    %89 = vmatpush1.bf16.msra.mxu0 0
    %90 = vmatprep.subr.bf16.mxu0 0
    %91 = vmatpush1.bf16.msra.mxu0 0
    %92 = vmatprep.subr.bf16.mxu0 0
    %93 = vmatpush1.bf16.msra.mxu0 0
    %94 = vmatprep.subr.bf16.mxu0 0
    %95 = vmatpush1.bf16.msra.mxu0 0
    %96 = vmatprep.mubr.bf16.mxu0 0
    %97 = vmatmul.mubr.bf16.gmra.mrb[0].mxu0 %v55
    %v98 = vpop.f32.mrb[0].mxu0
    %v99 = vadd.f32 %v46, %v98
    %v100 = vpop.f32.mrb[0].mxu0
    %v101 = vpop.f32.mrb[0].mxu0
    %v102 = vpop.f32.mrb[0].mxu0
    %103 = vdwg.mxu0
    %104 = vst [vmem:[%s3] sm:$0xff] %v99
    // Predicated region
    $region22: #{_lambda_.11} parent=1 // pred_check
      _
    $region23: #{_lambda_.11} parent=1 // pred_check_branch
      %106 = sbr.rel (0) target = $region25
    $region24: #{_lambda_.11} parent=1 // pred_region
      _
    $region25: #{_lambda_.11} parent=1 // pred_fallthru
      _
    // Predicated region
    $region26: #{_lambda_.11} parent=1 // pred_check
      _
    $region27: #{_lambda_.11} parent=1 // pred_check_branch
      %108 = sbr.rel (0) target = $region29
    $region28: #{_lambda_.11} parent=1 // pred_region
      _
    $region29: #{_lambda_.11} parent=1 // pred_fallthru
      _
    %109 = vsyncpa [#allocation3], 1
    %110 = vsyncpa [#allocation5], 1

// kernel: _lambda_.16
$region0: #{_lambda_.16}
  #allocation0 [shape = 'u32[]', space=smem, size = 0x4, offset = 0x4, fixed_abs, tag = 'smem constant byte address 0x4 - core index']
  #allocation1 [shape = 'u32[144,128]{1,0:T(1,128)}', space=vmem, size = 0x12000, scoped, tag = 'internal scratch']
  %s0 = inlined_call_operand.hbm [shape: bf16[4,9], index: 0, kind: input, shape index: {}]
  %s1 = inlined_call_operand.vmem [shape: bf16[9,512], index: 1, kind: input, shape index: {}]
  %s2 = inlined_call_operand.hbm [shape: f32[4,1], index: 2, kind: input, shape index: {}]
  %s3 = inlined_call_operand.vmem [shape: f32[4,512], index: 3, kind: output, shape index: {}]
  %s4 = sld [smem:[#allocation0]]
  $region30: #{_lambda_.16} parent=0
    _
  %s6 = ssub.s32 1, %s4
  %s7 = scalar_select 0, %s6, %s4
  $region1: #{_lambda_.16} parent=0
    #allocation2 [shape = 'u8[1024]{0}', space=vmem, size = 0x400, scoped, tag = 'input window, operand 0, single buffered']
    #allocation3 [shape = 's32[1]{0}', space=sflag, size = 0x4, scoped, tag = 'scoped memory for _lambda_.16']
    #allocation4 [shape = 'u8[2048]{0}', space=vmem, size = 0x800, scoped, tag = 'input window, operand 2, single buffered']
    #allocation5 [shape = 's32[1]{0}', space=sflag, size = 0x4, scoped, tag = 'scoped memory for _lambda_.16']
    %8 = vsyncpa [#allocation3], 0
    %9 = vsyncpa [#allocation5], 0
    // Predicated region
    $region2: #{_lambda_.16} parent=1 // pred_check
      _
    $region3: #{_lambda_.16} parent=1 // pred_check_branch
      %11 = sbr.rel (0) target = $region5
    $region4: #{_lambda_.16} parent=1 // pred_region
      %s13 = ssub.s32 32, 32
      %14 = vsyncadd [#allocation3], %s13
      %s16 = sshll.u32 [#allocation2], 4
      %s17 = int_to_ptr.vmem [resolvable:$true] %s16
      %19 = dma.hbm_to_vmem [thread:$0]  %s0, 32, %s17, [#allocation3]
    $region5: #{_lambda_.16} parent=1 // pred_fallthru
      _
    // Predicated region
    $region6: #{_lambda_.16} parent=1 // pred_check
      _
    $region7: #{_lambda_.16} parent=1 // pred_check_branch
      %21 = sbr.rel (0) target = $region9
    $region8: #{_lambda_.16} parent=1 // pred_region
      _
    $region9: #{_lambda_.16} parent=1 // pred_fallthru
      _
    // Predicated region
    $region10: #{_lambda_.16} parent=1 // pred_check
      _
    $region11: #{_lambda_.16} parent=1 // pred_check_branch
      %23 = sbr.rel (0) target = $region13
    $region12: #{_lambda_.16} parent=1 // pred_region
      %s25 = ssub.s32 64, 64
      %26 = vsyncadd [#allocation5], %s25
      %s28 = sshll.u32 [#allocation4], 4
      %s29 = int_to_ptr.vmem [resolvable:$true] %s28
      %31 = dma.hbm_to_vmem [thread:$0]  %s2, 64, %s29, [#allocation5]
    $region13: #{_lambda_.16} parent=1 // pred_fallthru
      _
    // Predicated region
    $region14: #{_lambda_.16} parent=1 // pred_check
      _
    $region15: #{_lambda_.16} parent=1 // pred_check_branch
      %33 = sbr.rel (0) target = $region17
    $region16: #{_lambda_.16} parent=1 // pred_region
      %34 = dma.done [#allocation3], 32
    $region17: #{_lambda_.16} parent=1 // pred_fallthru
      _
    // Predicated region
    $region18: #{_lambda_.16} parent=1 // pred_check
      _
    $region19: #{_lambda_.16} parent=1 // pred_check_branch
      %36 = sbr.rel (0) target = $region21
    $region20: #{_lambda_.16} parent=1 // pred_region
      %37 = dma.done [#allocation5], 64
    $region21: #{_lambda_.16} parent=1 // pred_fallthru
      _
    %v39 = vld [vmem:[#allocation2] sm:$0x3]
    %v40 = vld [vmem:[%s1] sm:$0xff]
    %v41 = vld [vmem:[%s1 + $0x8] sm:$0xff]
    %v42 = vld [vmem:[%s1 + $0x10] sm:$0x11]
    %v43 = vld [vmem:[%s1 + $0x18] sm:$0x11]
    %v44 = vld [vmem:[#allocation4] sm:$0xf]
    %46 = vset.pattern.permute.xlu0 0
    %47 = vperm.xlu0 %46, %v44
    %v48 = vpop.permute.xlu0 %47
    %v54 = vunpack.c.l.b16 %v40
    %v55 = vunpack.c.h.b16 %v40
    %v56 = vunpack.c.l.b16 %v41
    %v57 = vunpack.c.h.b16 %v41
    %v58 = vunpack.c.l.b16 %v42
    %v59 = vunpack.c.h.b16 %v42
    %v60 = vunpack.c.l.b16 %v43
    %v61 = vunpack.c.h.b16 %v43
    %v62 = vpack.c.b16 %v58, %v54
    %v63 = vpack.c.b16 %v59, %v55
    %v64 = vpack.c.b16 %v60, %v56
    %v65 = vpack.c.b16 %v61, %v57
    %vm66 = vcmask 72704
    %v68 = vsel %vm66, %v39, 0
    %vm70 = vcmask 1043456
    %vm71 = vcmask 1044480
    %v72 = vsel %vm70, 4294967295, 65535
    %v73 = vsel %vm71, %v72, 0
    %v75 = vand.u32 %v62, %v73
    %v78 = vand.u32 %v63, %v73
    %v81 = vand.u32 %v64, %v73
    %v84 = vand.u32 %v65, %v73
    %86 = vmatprep.subr.bf16.mxu0 %v78
    %87 = vmatpush1.bf16.msra.mxu0 %v75
    %88 = vmatprep.subr.bf16.mxu0 0
    %89 = vmatpush1.bf16.msra.mxu0 0
    %90 = vmatprep.subr.bf16.mxu0 0
    %91 = vmatpush1.bf16.msra.mxu0 0
    %92 = vmatprep.subr.bf16.mxu0 0
    %93 = vmatpush1.bf16.msra.mxu0 0
    %94 = vmatprep.subr.bf16.mxu0 0
    %95 = vmatpush1.bf16.msra.mxu0 0
    %96 = vmatprep.subr.bf16.mxu0 0
    %97 = vmatpush1.bf16.msra.mxu0 0
    %98 = vmatprep.subr.bf16.mxu0 0
    %99 = vmatpush1.bf16.msra.mxu0 0
    %100 = vmatprep.subr.bf16.mxu0 0
    %101 = vmatpush1.bf16.msra.mxu0 0
    %102 = vmatprep.subr.bf16.mxu0 0
    %103 = vmatpush1.bf16.msra.mxu0 0
    %104 = vmatprep.subr.bf16.mxu0 0
    %105 = vmatpush1.bf16.msra.mxu0 0
    %106 = vmatprep.subr.bf16.mxu0 0
    %107 = vmatpush1.bf16.msra.mxu0 0
    %108 = vmatprep.subr.bf16.mxu0 0
    %109 = vmatpush1.bf16.msra.mxu0 0
    %110 = vmatprep.subr.bf16.mxu0 0
    %111 = vmatpush1.bf16.msra.mxu0 0
    %112 = vmatprep.subr.bf16.mxu0 0
    %113 = vmatpush1.bf16.msra.mxu0 0
    %114 = vmatprep.subr.bf16.mxu0 0
    %115 = vmatpush1.bf16.msra.mxu0 0
    %116 = vmatprep.subr.bf16.mxu0 0
    %117 = vmatpush1.bf16.msra.mxu0 0
    %118 = vmatprep.mubr.bf16.mxu0 0
    %119 = vmatmul.mubr.bf16.gmra.mrb[0].mxu0 %v68
    %v120 = vpop.f32.mrb[0].mxu0
    %v121 = vadd.f32 %v48, %v120
    %v122 = vpop.f32.mrb[0].mxu0
    %v123 = vadd.f32 %v48, %v122
    %v124 = vpop.f32.mrb[0].mxu0
    %v125 = vpop.f32.mrb[0].mxu0
    %126 = vdwg.mxu0
    %127 = vmatprep.subr.bf16.mxu0 %v84
    %128 = vmatpush1.bf16.msra.mxu0 %v81
    %129 = vmatprep.subr.bf16.mxu0 0
    %130 = vmatpush1.bf16.msra.mxu0 0
    %131 = vmatprep.subr.bf16.mxu0 0
    %132 = vmatpush1.bf16.msra.mxu0 0
    %133 = vmatprep.subr.bf16.mxu0 0
    %134 = vmatpush1.bf16.msra.mxu0 0
    %135 = vmatprep.subr.bf16.mxu0 0
    %136 = vmatpush1.bf16.msra.mxu0 0
    %137 = vmatprep.subr.bf16.mxu0 0
    %138 = vmatpush1.bf16.msra.mxu0 0
    %139 = vmatprep.subr.bf16.mxu0 0
    %140 = vmatpush1.bf16.msra.mxu0 0
    %141 = vmatprep.subr.bf16.mxu0 0
    %142 = vmatpush1.bf16.msra.mxu0 0
    %143 = vmatprep.subr.bf16.mxu0 0
    %144 = vmatpush1.bf16.msra.mxu0 0
    %145 = vmatprep.subr.bf16.mxu0 0
    %146 = vmatpush1.bf16.msra.mxu0 0
    %147 = vmatprep.subr.bf16.mxu0 0
    %148 = vmatpush1.bf16.msra.mxu0 0
    %149 = vmatprep.subr.bf16.mxu0 0
    %150 = vmatpush1.bf16.msra.mxu0 0
    %151 = vmatprep.subr.bf16.mxu0 0
    %152 = vmatpush1.bf16.msra.mxu0 0
    %153 = vmatprep.subr.bf16.mxu0 0
    %154 = vmatpush1.bf16.msra.mxu0 0
    %155 = vmatprep.subr.bf16.mxu0 0
    %156 = vmatpush1.bf16.msra.mxu0 0
    %157 = vmatprep.subr.bf16.mxu0 0
    %158 = vmatpush1.bf16.msra.mxu0 0
    %159 = vmatprep.mubr.bf16.mxu0 0
    %160 = vmatmul.mubr.bf16.gmra.mrb[0].mxu0 %v68
    %v161 = vpop.f32.mrb[0].mxu0
    %v162 = vadd.f32 %v48, %v161
    %v163 = vpop.f32.mrb[0].mxu0
    %v164 = vadd.f32 %v48, %v163
    %v165 = vpop.f32.mrb[0].mxu0
    %v166 = vpop.f32.mrb[0].mxu0
    %167 = vdwg.mxu0
    %v172 = vcombine.low %v121, %v123
    %v173 = vcombine.low %v162, %v164
    %176 = vst [vmem:[%s3] sm:$0xff] %v172
    %177 = vst [vmem:[%s3 + $0x8] sm:$0xff] %v173
    // Predicated region
    $region22: #{_lambda_.16} parent=1 // pred_check
      _
    $region23: #{_lambda_.16} parent=1 // pred_check_branch
      %179 = sbr.rel (0) target = $region25
    $region24: #{_lambda_.16} parent=1 // pred_region
      _
    $region25: #{_lambda_.16} parent=1 // pred_fallthru
      _
    // Predicated region
    $region26: #{_lambda_.16} parent=1 // pred_check
      _
    $region27: #{_lambda_.16} parent=1 // pred_check_branch
      %181 = sbr.rel (0) target = $region29
    $region28: #{_lambda_.16} parent=1 // pred_region
      _
    $region29: #{_lambda_.16} parent=1 // pred_fallthru
      _
    %182 = vsyncpa [#allocation3], 1
    %183 = vsyncpa [#allocation5], 1

// kernel: _lambda_.17
$region0: #{_lambda_.17}
  #allocation0 [shape = 'u32[]', space=smem, size = 0x4, offset = 0x4, fixed_abs, tag = 'smem constant byte address 0x4 - core index']
  #allocation1 [shape = 'u32[144,128]{1,0:T(1,128)}', space=vmem, size = 0x12000, scoped, tag = 'internal scratch']
  %s0 = inlined_call_operand.vmem [shape: bf16[4,36], index: 0, kind: input, shape index: {}]
  %s1 = inlined_call_operand.vmem [shape: bf16[36,512], index: 1, kind: input, shape index: {}]
  %s2 = inlined_call_operand.vmem [shape: f32[4,1], index: 2, kind: input, shape index: {}]
  %s3 = inlined_call_operand.vmem [shape: f32[4,512], index: 3, kind: output, shape index: {}]
  %s4 = sld [smem:[#allocation0]]
  $region22: #{_lambda_.17} parent=0
    _
  %s6 = ssub.s32 1, %s4
  %s7 = scalar_select 0, %s6, %s4
  // Predicated region
  $region2: #{_lambda_.17} parent=0 // pred_check
    _
  $region3: #{_lambda_.17} parent=0 // pred_check_branch
    %9 = sbr.rel (0) target = $region5
  $region4: #{_lambda_.17} parent=0 // pred_region
    _
  $region5: #{_lambda_.17} parent=0 // pred_fallthru
    _
  // Predicated region
  $region6: #{_lambda_.17} parent=0 // pred_check
    _
  $region7: #{_lambda_.17} parent=0 // pred_check_branch
    %11 = sbr.rel (0) target = $region9
  $region8: #{_lambda_.17} parent=0 // pred_region
    _
  $region9: #{_lambda_.17} parent=0 // pred_fallthru
    _
  // Predicated region
  $region10: #{_lambda_.17} parent=0 // pred_check
    _
  $region11: #{_lambda_.17} parent=0 // pred_check_branch
    %13 = sbr.rel (0) target = $region13
  $region12: #{_lambda_.17} parent=0 // pred_region
    _
  $region13: #{_lambda_.17} parent=0 // pred_fallthru
    _
  %v15 = vld [vmem:[%s0] sm:$0x3]
  %v16 = vld [vmem:[%s1] sm:$0xff]
  %v17 = vld [vmem:[%s1 + $0x8] sm:$0xff]
  %v18 = vld [vmem:[%s1 + $0x10] sm:$0xff]
  %v19 = vld [vmem:[%s1 + $0x18] sm:$0xff]
  %v20 = vld [vmem:[%s1 + $0x20] sm:$0xff]
  %v21 = vld [vmem:[%s1 + $0x28] sm:$0xff]
  %v22 = vld [vmem:[%s1 + $0x30] sm:$0xff]
  %v23 = vld [vmem:[%s1 + $0x38] sm:$0xff]
  %v24 = vld [vmem:[%s1 + $0x40] sm:$0x33]
  %v25 = vld [vmem:[%s1 + $0x48] sm:$0x33]
  %v26 = vld [vmem:[%s2] sm:$0xf]
  %28 = vset.pattern.permute.xlu0 0
  %29 = vperm.xlu0 %28, %v26
  %v30 = vpop.permute.xlu0 %29
  %v42 = vunpack.c.l.b16 %v16
  %v43 = vunpack.c.h.b16 %v16
  %v44 = vunpack.c.l.b16 %v17
  %v45 = vunpack.c.h.b16 %v17
  %v46 = vunpack.c.l.b16 %v18
  %v47 = vunpack.c.h.b16 %v18
  %v48 = vunpack.c.l.b16 %v19
  %v49 = vunpack.c.h.b16 %v19
  %v50 = vunpack.c.l.b16 %v20
  %v51 = vunpack.c.h.b16 %v20
  %v52 = vunpack.c.l.b16 %v21
  %v53 = vunpack.c.h.b16 %v21
  %v54 = vunpack.c.l.b16 %v22
  %v55 = vunpack.c.h.b16 %v22
  %v56 = vunpack.c.l.b16 %v23
  %v57 = vunpack.c.h.b16 %v23
  %v58 = vunpack.c.l.b16 %v24
  %v59 = vunpack.c.h.b16 %v24
  %v60 = vunpack.c.l.b16 %v25
  %v61 = vunpack.c.h.b16 %v25
  %v62 = vpack.c.b16 %v46, %v42
  %v63 = vpack.c.b16 %v47, %v43
  %v64 = vpack.c.b16 %v48, %v44
  %v65 = vpack.c.b16 %v49, %v45
  %v66 = vpack.c.b16 %v54, %v50
  %v67 = vpack.c.b16 %v55, %v51
  %v68 = vpack.c.b16 %v56, %v52
  %v69 = vpack.c.b16 %v57, %v53
  %v70 = vpack.c.b16 %v58, %v58
  %v71 = vpack.c.b16 %v59, %v59
  %v72 = vpack.c.b16 %v60, %v60
  %v73 = vpack.c.b16 %v61, %v61
  %vm82 = vcmask 293888
  %v84 = vsel %vm82, %v15, 0
  %vm86 = vcmask 1041408
  %v88 = vsel %vm86, %v70, 0
  %v91 = vsel %vm86, %v71, 0
  %v94 = vsel %vm86, %v72, 0
  %v97 = vsel %vm86, %v73, 0
  %99 = vmatprep.subr.bf16.mxu0 %v63
  %100 = vmatpush1.bf16.msra.mxu0 %v62
  %101 = vmatprep.subr.bf16.mxu0 %v67
  %102 = vmatpush1.bf16.msra.mxu0 %v66
  %103 = vmatprep.subr.bf16.mxu0 %v91
  %104 = vmatpush1.bf16.msra.mxu0 %v88
  %105 = vmatprep.subr.bf16.mxu0 0
  %106 = vmatpush1.bf16.msra.mxu0 0
  %107 = vmatprep.subr.bf16.mxu0 0
  %108 = vmatpush1.bf16.msra.mxu0 0
  %109 = vmatprep.subr.bf16.mxu0 0
  %110 = vmatpush1.bf16.msra.mxu0 0
  %111 = vmatprep.subr.bf16.mxu0 0
  %112 = vmatpush1.bf16.msra.mxu0 0
  %113 = vmatprep.subr.bf16.mxu0 0
  %114 = vmatpush1.bf16.msra.mxu0 0
  %115 = vmatprep.subr.bf16.mxu0 0
  %116 = vmatpush1.bf16.msra.mxu0 0
  %117 = vmatprep.subr.bf16.mxu0 0
  %118 = vmatpush1.bf16.msra.mxu0 0
  %119 = vmatprep.subr.bf16.mxu0 0
  %120 = vmatpush1.bf16.msra.mxu0 0
  %121 = vmatprep.subr.bf16.mxu0 0
  %122 = vmatpush1.bf16.msra.mxu0 0
  %123 = vmatprep.subr.bf16.mxu0 0
  %124 = vmatpush1.bf16.msra.mxu0 0
  %125 = vmatprep.subr.bf16.mxu0 0
  %126 = vmatpush1.bf16.msra.mxu0 0
  %127 = vmatprep.subr.bf16.mxu0 0
  %128 = vmatpush1.bf16.msra.mxu0 0
  %129 = vmatprep.subr.bf16.mxu0 0
  %130 = vmatpush1.bf16.msra.mxu0 0
  %131 = vmatprep.mubr.bf16.mxu0 0
  %132 = vmatmul.mubr.bf16.gmra.mrb[0].mxu0 %v84
  %v133 = vpop.f32.mrb[0].mxu0
  %v134 = vadd.f32 %v30, %v133
  %v135 = vpop.f32.mrb[0].mxu0
  %v136 = vadd.f32 %v30, %v135
  %v137 = vpop.f32.mrb[0].mxu0
  %v138 = vpop.f32.mrb[0].mxu0
  %139 = vdwg.mxu0
  %140 = vmatprep.subr.bf16.mxu0 %v65
  %141 = vmatpush1.bf16.msra.mxu0 %v64
  %142 = vmatprep.subr.bf16.mxu0 %v69
  %143 = vmatpush1.bf16.msra.mxu0 %v68
  %144 = vmatprep.subr.bf16.mxu0 %v97
  %145 = vmatpush1.bf16.msra.mxu0 %v94
  %146 = vmatprep.subr.bf16.mxu0 0
  %147 = vmatpush1.bf16.msra.mxu0 0
  %148 = vmatprep.subr.bf16.mxu0 0
  %149 = vmatpush1.bf16.msra.mxu0 0
  %150 = vmatprep.subr.bf16.mxu0 0
  %151 = vmatpush1.bf16.msra.mxu0 0
  %152 = vmatprep.subr.bf16.mxu0 0
  %153 = vmatpush1.bf16.msra.mxu0 0
  %154 = vmatprep.subr.bf16.mxu0 0
  %155 = vmatpush1.bf16.msra.mxu0 0
  %156 = vmatprep.subr.bf16.mxu0 0
  %157 = vmatpush1.bf16.msra.mxu0 0
  %158 = vmatprep.subr.bf16.mxu0 0
  %159 = vmatpush1.bf16.msra.mxu0 0
  %160 = vmatprep.subr.bf16.mxu0 0
  %161 = vmatpush1.bf16.msra.mxu0 0
  %162 = vmatprep.subr.bf16.mxu0 0
  %163 = vmatpush1.bf16.msra.mxu0 0
  %164 = vmatprep.subr.bf16.mxu0 0
  %165 = vmatpush1.bf16.msra.mxu0 0
  %166 = vmatprep.subr.bf16.mxu0 0
  %167 = vmatpush1.bf16.msra.mxu0 0
  %168 = vmatprep.subr.bf16.mxu0 0
  %169 = vmatpush1.bf16.msra.mxu0 0
  %170 = vmatprep.subr.bf16.mxu0 0
  %171 = vmatpush1.bf16.msra.mxu0 0
  %172 = vmatprep.mubr.bf16.mxu0 0
  %173 = vmatmul.mubr.bf16.gmra.mrb[0].mxu0 %v84
  %v174 = vpop.f32.mrb[0].mxu0
  %v175 = vadd.f32 %v30, %v174
  %v176 = vpop.f32.mrb[0].mxu0
  %v177 = vadd.f32 %v30, %v176
  %v178 = vpop.f32.mrb[0].mxu0
  %v179 = vpop.f32.mrb[0].mxu0
  %180 = vdwg.mxu0
  %v181 = vsub.f32 0.0, %v134
  %v182 = vsub.f32 0.0, %v136
  %v183 = vsub.f32 0.0, %v175
  %v184 = vsub.f32 0.0, %v177
  %v185 = vmul.f32 %v181, 1.442695
  %v186 = vpow.pop %v185
  %v187 = vmul.f32 %v182, 1.442695
  %v188 = vpow.pop %v187
  %v189 = vmul.f32 %v183, 1.442695
  %v190 = vpow.pop %v189
  %v191 = vmul.f32 %v184, 1.442695
  %v192 = vpow.pop %v191
  %v193 = vadd.f32 %v186, 1.0
  %v194 = vadd.f32 %v188, 1.0
  %v195 = vadd.f32 %v190, 1.0
  %v196 = vadd.f32 %v192, 1.0
  %v197 = vrcp.pop %v193
  %v198 = vmul.f32 1.0, %v197
  %v199 = vrcp.pop %v194
  %v200 = vmul.f32 1.0, %v199
  %v201 = vrcp.pop %v195
  %v202 = vmul.f32 1.0, %v201
  %v203 = vrcp.pop %v196
  %v204 = vmul.f32 1.0, %v203
  %v209 = vcombine.low %v198, %v200
  %v210 = vcombine.low %v202, %v204
  %213 = vst [vmem:[%s3] sm:$0xff] %v209
  %214 = vst [vmem:[%s3 + $0x8] sm:$0xff] %v210
  // Predicated region
  $region14: #{_lambda_.17} parent=0 // pred_check
    _
  $region15: #{_lambda_.17} parent=0 // pred_check_branch
    %216 = sbr.rel (0) target = $region17
  $region16: #{_lambda_.17} parent=0 // pred_region
    _
  $region17: #{_lambda_.17} parent=0 // pred_fallthru
    _
  // Predicated region
  $region18: #{_lambda_.17} parent=0 // pred_check
    _
  $region19: #{_lambda_.17} parent=0 // pred_check_branch
    %218 = sbr.rel (0) target = $region21
  $region20: #{_lambda_.17} parent=0 // pred_region
    _
  $region21: #{_lambda_.17} parent=0 // pred_fallthru
    _

// kernel: _lambda_.12
$region0: #{_lambda_.12}
  #allocation0 [shape = 'u32[]', space=smem, size = 0x4, offset = 0x4, fixed_abs, tag = 'smem constant byte address 0x4 - core index']
  #allocation1 [shape = 'u32[144,128]{1,0:T(1,128)}', space=vmem, size = 0x12000, scoped, tag = 'internal scratch']
  %s0 = inlined_call_operand.vmem [shape: bf16[8,72], index: 0, kind: input, shape index: {}]
  %s1 = inlined_call_operand.vmem [shape: bf16[72,128], index: 1, kind: input, shape index: {}]
  %s2 = inlined_call_operand.vmem [shape: f32[8,1], index: 2, kind: input, shape index: {}]
  %s3 = inlined_call_operand.vmem [shape: f32[8,128], index: 3, kind: output, shape index: {}]
  %s4 = sld [smem:[#allocation0]]
  $region22: #{_lambda_.12} parent=0
    _
  %s6 = ssub.s32 1, %s4
  %s7 = scalar_select 0, %s6, %s4
  // Predicated region
  $region2: #{_lambda_.12} parent=0 // pred_check
    _
  $region3: #{_lambda_.12} parent=0 // pred_check_branch
    %9 = sbr.rel (0) target = $region5
  $region4: #{_lambda_.12} parent=0 // pred_region
    _
  $region5: #{_lambda_.12} parent=0 // pred_fallthru
    _
  // Predicated region
  $region6: #{_lambda_.12} parent=0 // pred_check
    _
  $region7: #{_lambda_.12} parent=0 // pred_check_branch
    %11 = sbr.rel (0) target = $region9
  $region8: #{_lambda_.12} parent=0 // pred_region
    _
  $region9: #{_lambda_.12} parent=0 // pred_fallthru
    _
  // Predicated region
  $region10: #{_lambda_.12} parent=0 // pred_check
    _
  $region11: #{_lambda_.12} parent=0 // pred_check_branch
    %13 = sbr.rel (0) target = $region13
  $region12: #{_lambda_.12} parent=0 // pred_region
    _
  $region13: #{_lambda_.12} parent=0 // pred_fallthru
    _
  %v15 = vld [vmem:[%s0] sm:$0xf]
  %v16 = vld [vmem:[%s1] sm:$0xf]
  %v17 = vld [vmem:[%s1 + $0x4] sm:$0xf]
  %v18 = vld [vmem:[%s1 + $0x8] sm:$0xf]
  %v19 = vld [vmem:[%s1 + $0xc] sm:$0xf]
  %v20 = vld [vmem:[%s1 + $0x10] sm:$0xf]
  %v21 = vld [vmem:[%s1 + $0x14] sm:$0xf]
  %v22 = vld [vmem:[%s1 + $0x18] sm:$0xf]
  %v23 = vld [vmem:[%s1 + $0x1c] sm:$0xf]
  %v24 = vld [vmem:[%s1 + $0x20] sm:$0xf]
  %v25 = vld [vmem:[%s2] sm:$0xff]
  %27 = vset.pattern.permute.xlu0 0
  %28 = vperm.xlu0 %27, %v25
  %v29 = vpop.permute.xlu0 %28
  %v40 = vunpack.c.l.b16 %v16
  %v41 = vunpack.c.l.b16 %v17
  %v42 = vunpack.c.l.b16 %v18
  %v43 = vunpack.c.l.b16 %v19
  %v44 = vunpack.c.l.b16 %v20
  %v45 = vunpack.c.l.b16 %v21
  %v46 = vunpack.c.l.b16 %v22
  %v47 = vunpack.c.l.b16 %v23
  %v48 = vunpack.c.l.b16 %v24
  %v49 = vpack.c.b16 %v41, %v40
  %v50 = vpack.c.b16 %v43, %v42
  %v51 = vpack.c.b16 %v45, %v44
  %v52 = vpack.c.b16 %v47, %v46
  %v53 = vpack.c.b16 %v48, %v48
  %vm58 = vcmask 588800
  %v60 = vsel %vm58, %v15, 0
  %vm62 = vcmask 1043456
  %v64 = vsel %vm62, %v53, 0
  %66 = vmatprep.subr.bf16.mxu0 0
  %67 = vmatpush1.bf16.msra.mxu0 %v49
  %68 = vmatprep.subr.bf16.mxu0 0
  %69 = vmatpush1.bf16.msra.mxu0 %v50
  %70 = vmatprep.subr.bf16.mxu0 0
  %71 = vmatpush1.bf16.msra.mxu0 %v51
  %72 = vmatprep.subr.bf16.mxu0 0
  %73 = vmatpush1.bf16.msra.mxu0 %v52
  %74 = vmatprep.subr.bf16.mxu0 0
  %75 = vmatpush1.bf16.msra.mxu0 %v64
  %76 = vmatprep.subr.bf16.mxu0 0
  %77 = vmatpush1.bf16.msra.mxu0 0
  %78 = vmatprep.subr.bf16.mxu0 0
  %79 = vmatpush1.bf16.msra.mxu0 0
  %80 = vmatprep.subr.bf16.mxu0 0
  %81 = vmatpush1.bf16.msra.mxu0 0
  %82 = vmatprep.subr.bf16.mxu0 0
  %83 = vmatpush1.bf16.msra.mxu0 0
  %84 = vmatprep.subr.bf16.mxu0 0
  %85 = vmatpush1.bf16.msra.mxu0 0
  %86 = vmatprep.subr.bf16.mxu0 0
  %87 = vmatpush1.bf16.msra.mxu0 0
  %88 = vmatprep.subr.bf16.mxu0 0
  %89 = vmatpush1.bf16.msra.mxu0 0
  %90 = vmatprep.subr.bf16.mxu0 0
  %91 = vmatpush1.bf16.msra.mxu0 0
  %92 = vmatprep.subr.bf16.mxu0 0
  %93 = vmatpush1.bf16.msra.mxu0 0
  %94 = vmatprep.subr.bf16.mxu0 0
  %95 = vmatpush1.bf16.msra.mxu0 0
  %96 = vmatprep.subr.bf16.mxu0 0
  %97 = vmatpush1.bf16.msra.mxu0 0
  %98 = vmatprep.mubr.bf16.mxu0 0
  %99 = vmatmul.mubr.bf16.gmra.mrb[0].mxu0 %v60
  %v100 = vpop.f32.mrb[0].mxu0
  %v101 = vadd.f32 %v29, %v100
  %v102 = vpop.f32.mrb[0].mxu0
  %v103 = vpop.f32.mrb[0].mxu0
  %v104 = vpop.f32.mrb[0].mxu0
  %105 = vdwg.mxu0
  %v106 = vsub.f32 0.0, %v101
  %v107 = vmul.f32 %v106, 1.442695
  %v108 = vpow.pop %v107
  %v109 = vadd.f32 %v108, 1.0
  %v110 = vrcp.pop %v109
  %v111 = vmul.f32 1.0, %v110
  %112 = vst [vmem:[%s3] sm:$0xff] %v111
  // Predicated region
  $region14: #{_lambda_.12} parent=0 // pred_check
    _
  $region15: #{_lambda_.12} parent=0 // pred_check_branch
    %114 = sbr.rel (0) target = $region17
  $region16: #{_lambda_.12} parent=0 // pred_region
    _
  $region17: #{_lambda_.12} parent=0 // pred_fallthru
    _
  // Predicated region
  $region18: #{_lambda_.12} parent=0 // pred_check
    _
  $region19: #{_lambda_.12} parent=0 // pred_check_branch
    %116 = sbr.rel (0) target = $region21
  $region20: #{_lambda_.12} parent=0 // pred_region
    _
  $region21: #{_lambda_.12} parent=0 // pred_fallthru
    _

// kernel: _lambda_.14
$region0: #{_lambda_.14}
  #allocation0 [shape = 'u32[]', space=smem, size = 0x4, offset = 0x4, fixed_abs, tag = 'smem constant byte address 0x4 - core index']
  #allocation1 [shape = 'u32[144,128]{1,0:T(1,128)}', space=vmem, size = 0x12000, scoped, tag = 'internal scratch']
  %s0 = inlined_call_operand.vmem [shape: bf16[8,144], index: 0, kind: input, shape index: {}]
  %s1 = inlined_call_operand.vmem [shape: bf16[144,128], index: 1, kind: input, shape index: {}]
  %s2 = inlined_call_operand.vmem [shape: f32[8,1], index: 2, kind: input, shape index: {}]
  %s3 = inlined_call_operand.vmem [shape: f32[8,128], index: 3, kind: output, shape index: {}]
  %s4 = sld [smem:[#allocation0]]
  $region22: #{_lambda_.14} parent=0
    _
  %s6 = ssub.s32 1, %s4
  %s7 = scalar_select 0, %s6, %s4
  // Predicated region
  $region2: #{_lambda_.14} parent=0 // pred_check
    _
  $region3: #{_lambda_.14} parent=0 // pred_check_branch
    %9 = sbr.rel (0) target = $region5
  $region4: #{_lambda_.14} parent=0 // pred_region
    _
  $region5: #{_lambda_.14} parent=0 // pred_fallthru
    _
  // Predicated region
  $region6: #{_lambda_.14} parent=0 // pred_check
    _
  $region7: #{_lambda_.14} parent=0 // pred_check_branch
    %11 = sbr.rel (0) target = $region9
  $region8: #{_lambda_.14} parent=0 // pred_region
    _
  $region9: #{_lambda_.14} parent=0 // pred_fallthru
    _
  // Predicated region
  $region10: #{_lambda_.14} parent=0 // pred_check
    _
  $region11: #{_lambda_.14} parent=0 // pred_check_branch
    %13 = sbr.rel (0) target = $region13
  $region12: #{_lambda_.14} parent=0 // pred_region
    _
  $region13: #{_lambda_.14} parent=0 // pred_fallthru
    _
  %v15 = vld [vmem:[%s0] sm:$0xff]
  %v16 = vld [vmem:[%s1] sm:$0xf]
  %v17 = vld [vmem:[%s1 + $0x4] sm:$0xf]
  %v18 = vld [vmem:[%s1 + $0x8] sm:$0xf]
  %v19 = vld [vmem:[%s1 + $0xc] sm:$0xf]
  %v20 = vld [vmem:[%s1 + $0x10] sm:$0xf]
  %v21 = vld [vmem:[%s1 + $0x14] sm:$0xf]
  %v22 = vld [vmem:[%s1 + $0x18] sm:$0xf]
  %v23 = vld [vmem:[%s1 + $0x1c] sm:$0xf]
  %v24 = vld [vmem:[%s1 + $0x20] sm:$0xf]
  %v25 = vld [vmem:[%s1 + $0x24] sm:$0xf]
  %v26 = vld [vmem:[%s1 + $0x28] sm:$0xf]
  %v27 = vld [vmem:[%s1 + $0x2c] sm:$0xf]
  %v28 = vld [vmem:[%s1 + $0x30] sm:$0xf]
  %v29 = vld [vmem:[%s1 + $0x34] sm:$0xf]
  %v30 = vld [vmem:[%s1 + $0x38] sm:$0xf]
  %v31 = vld [vmem:[%s1 + $0x3c] sm:$0xf]
  %v32 = vld [vmem:[%s1 + $0x40] sm:$0xf]
  %v33 = vld [vmem:[%s1 + $0x44] sm:$0xf]
  %v34 = vld [vmem:[%s2] sm:$0xff]
  %36 = vset.pattern.permute.xlu0 0
  %37 = vperm.xlu0 %36, %v34
  %v38 = vpop.permute.xlu0 %37
  %v41 = vunpack.c.l.b16 %v15
  %v42 = vunpack.c.h.b16 %v15
  %v43 = vpack.c.b16 %v41, %v41
  %v44 = vpack.c.b16 %v42, %v42
  %v64 = vunpack.c.l.b16 %v16
  %v65 = vunpack.c.l.b16 %v17
  %v66 = vunpack.c.l.b16 %v18
  %v67 = vunpack.c.l.b16 %v19
  %v68 = vunpack.c.l.b16 %v20
  %v69 = vunpack.c.l.b16 %v21
  %v70 = vunpack.c.l.b16 %v22
  %v71 = vunpack.c.l.b16 %v23
  %v72 = vunpack.c.l.b16 %v24
  %v73 = vunpack.c.l.b16 %v25
  %v74 = vunpack.c.l.b16 %v26
  %v75 = vunpack.c.l.b16 %v27
  %v76 = vunpack.c.l.b16 %v28
  %v77 = vunpack.c.l.b16 %v29
  %v78 = vunpack.c.l.b16 %v30
  %v79 = vunpack.c.l.b16 %v31
  %v80 = vunpack.c.l.b16 %v32
  %v81 = vunpack.c.l.b16 %v33
  %v82 = vpack.c.b16 %v65, %v64
  %v83 = vpack.c.b16 %v67, %v66
  %v84 = vpack.c.b16 %v69, %v68
  %v85 = vpack.c.b16 %v71, %v70
  %v86 = vpack.c.b16 %v73, %v72
  %v87 = vpack.c.b16 %v75, %v74
  %v88 = vpack.c.b16 %v77, %v76
  %v89 = vpack.c.b16 %v79, %v78
  %v90 = vpack.c.b16 %v81, %v80
  %vm100 = vcmask 130048
  %v102 = vsel %vm100, %v44, 0
  %104 = vmatprep.subr.bf16.mxu0 0
  %105 = vmatpush1.bf16.msra.mxu0 %v82
  %106 = vmatprep.subr.bf16.mxu0 0
  %107 = vmatpush1.bf16.msra.mxu0 %v83
  %108 = vmatprep.subr.bf16.mxu0 0
  %109 = vmatpush1.bf16.msra.mxu0 %v84
  %110 = vmatprep.subr.bf16.mxu0 0
  %111 = vmatpush1.bf16.msra.mxu0 %v85
  %112 = vmatprep.subr.bf16.mxu0 0
  %113 = vmatpush1.bf16.msra.mxu0 %v86
  %114 = vmatprep.subr.bf16.mxu0 0
  %115 = vmatpush1.bf16.msra.mxu0 %v87
  %116 = vmatprep.subr.bf16.mxu0 0
  %117 = vmatpush1.bf16.msra.mxu0 %v88
  %118 = vmatprep.subr.bf16.mxu0 0
  %119 = vmatpush1.bf16.msra.mxu0 %v89
  %120 = vmatprep.subr.bf16.mxu0 0
  %121 = vmatpush1.bf16.msra.mxu0 %v90
  %122 = vmatprep.subr.bf16.mxu0 0
  %123 = vmatpush1.bf16.msra.mxu0 0
  %124 = vmatprep.subr.bf16.mxu0 0
  %125 = vmatpush1.bf16.msra.mxu0 0
  %126 = vmatprep.subr.bf16.mxu0 0
  %127 = vmatpush1.bf16.msra.mxu0 0
  %128 = vmatprep.subr.bf16.mxu0 0
  %129 = vmatpush1.bf16.msra.mxu0 0
  %130 = vmatprep.subr.bf16.mxu0 0
  %131 = vmatpush1.bf16.msra.mxu0 0
  %132 = vmatprep.subr.bf16.mxu0 0
  %133 = vmatpush1.bf16.msra.mxu0 0
  %134 = vmatprep.subr.bf16.mxu0 0
  %135 = vmatpush1.bf16.msra.mxu0 0
  %136 = vmatprep.mubr.bf16.mxu0 %v102
  %137 = vmatmul.mubr.bf16.gmra.mrb[0].mxu0 %v43
  %v138 = vpop.f32.mrb[0].mxu0
  %v139 = vadd.f32 %v38, %v138
  %v140 = vpop.f32.mrb[0].mxu0
  %v141 = vpop.f32.mrb[0].mxu0
  %v142 = vpop.f32.mrb[0].mxu0
  %143 = vdwg.mxu0
  %v144 = vmax.f32 %v139, 0.0
  %145 = vst [vmem:[%s3] sm:$0xff] %v144
  // Predicated region
  $region14: #{_lambda_.14} parent=0 // pred_check
    _
  $region15: #{_lambda_.14} parent=0 // pred_check_branch
    %147 = sbr.rel (0) target = $region17
  $region16: #{_lambda_.14} parent=0 // pred_region
    _
  $region17: #{_lambda_.14} parent=0 // pred_fallthru
    _
  // Predicated region
  $region18: #{_lambda_.14} parent=0 // pred_check
    _
  $region19: #{_lambda_.14} parent=0 // pred_check_branch
    %149 = sbr.rel (0) target = $region21
  $region20: #{_lambda_.14} parent=0 // pred_region
    _
  $region21: #{_lambda_.14} parent=0 // pred_fallthru
    _

// kernel: _lambda_.18
$region0: #{_lambda_.18}
  #allocation0 [shape = 'u32[]', space=smem, size = 0x4, offset = 0x4, fixed_abs, tag = 'smem constant byte address 0x4 - core index']
  #allocation1 [shape = 'u32[144,128]{1,0:T(1,128)}', space=vmem, size = 0x12000, scoped, tag = 'internal scratch']
  %s0 = inlined_call_operand.vmem [shape: bf16[16,8], index: 0, kind: input, shape index: {}]
  %s1 = inlined_call_operand.vmem [shape: bf16[8,128], index: 1, kind: input, shape index: {}]
  %s2 = inlined_call_operand.vmem [shape: f32[16,1], index: 2, kind: input, shape index: {}]
  %s3 = inlined_call_operand.vmem [shape: f32[16,128], index: 3, kind: output, shape index: {}]
  %s4 = sld [smem:[#allocation0]]
  $region22: #{_lambda_.18} parent=0
    _
  %s6 = ssub.s32 1, %s4
  %s7 = scalar_select 0, %s6, %s4
  // Predicated region
  $region2: #{_lambda_.18} parent=0 // pred_check
    _
  $region3: #{_lambda_.18} parent=0 // pred_check_branch
    %9 = sbr.rel (0) target = $region5
  $region4: #{_lambda_.18} parent=0 // pred_region
    _
  $region5: #{_lambda_.18} parent=0 // pred_fallthru
    _
  // Predicated region
  $region6: #{_lambda_.18} parent=0 // pred_check
    _
  $region7: #{_lambda_.18} parent=0 // pred_check_branch
    %11 = sbr.rel (0) target = $region9
  $region8: #{_lambda_.18} parent=0 // pred_region
    _
  $region9: #{_lambda_.18} parent=0 // pred_fallthru
    _
  // Predicated region
  $region10: #{_lambda_.18} parent=0 // pred_check
    _
  $region11: #{_lambda_.18} parent=0 // pred_check_branch
    %13 = sbr.rel (0) target = $region13
  $region12: #{_lambda_.18} parent=0 // pred_region
    _
  $region13: #{_lambda_.18} parent=0 // pred_fallthru
    _
  %v15 = vld [vmem:[%s0] sm:$0xf]
  %v16 = vld [vmem:[%s0 + $0x4] sm:$0xf]
  %v17 = vld [vmem:[%s1] sm:$0xf]
  %v18 = vld [vmem:[%s2] sm:$0xff]
  %v19 = vld [vmem:[%s2 + $0x8] sm:$0xff]
  %21 = vset.pattern.permute.xlu0 0
  %22 = vperm.xlu0 %21, %v18
  %v23 = vpop.permute.xlu0 %22
  %26 = vset.pattern.permute.xlu0 0
  %27 = vperm.xlu0 %26, %v19
  %v28 = vpop.permute.xlu0 %27
  %v32 = vunpack.c.l.b16 %v15
  %v33 = vunpack.c.l.b16 %v16
  %v34 = vpack.c.b16 %v33, %v32
  %vm35 = vcmask 64512
  %v37 = vsel %vm35, %v34, 0
  %vm39 = vcmask 1043456
  %v41 = vsel %vm39, %v17, 0
  %43 = vmatprep.subr.bf16.mxu0 0
  %44 = vmatpush1.bf16.msra.mxu0 %v41
  %45 = vmatprep.subr.bf16.mxu0 0
  %46 = vmatpush1.bf16.msra.mxu0 0
  %47 = vmatprep.subr.bf16.mxu0 0
  %48 = vmatpush1.bf16.msra.mxu0 0
  %49 = vmatprep.subr.bf16.mxu0 0
  %50 = vmatpush1.bf16.msra.mxu0 0
  %51 = vmatprep.subr.bf16.mxu0 0
  %52 = vmatpush1.bf16.msra.mxu0 0
  %53 = vmatprep.subr.bf16.mxu0 0
  %54 = vmatpush1.bf16.msra.mxu0 0
  %55 = vmatprep.subr.bf16.mxu0 0
  %56 = vmatpush1.bf16.msra.mxu0 0
  %57 = vmatprep.subr.bf16.mxu0 0
  %58 = vmatpush1.bf16.msra.mxu0 0
  %59 = vmatprep.subr.bf16.mxu0 0
  %60 = vmatpush1.bf16.msra.mxu0 0
  %61 = vmatprep.subr.bf16.mxu0 0
  %62 = vmatpush1.bf16.msra.mxu0 0
  %63 = vmatprep.subr.bf16.mxu0 0
  %64 = vmatpush1.bf16.msra.mxu0 0
  %65 = vmatprep.subr.bf16.mxu0 0
  %66 = vmatpush1.bf16.msra.mxu0 0
  %67 = vmatprep.subr.bf16.mxu0 0
  %68 = vmatpush1.bf16.msra.mxu0 0
  %69 = vmatprep.subr.bf16.mxu0 0
  %70 = vmatpush1.bf16.msra.mxu0 0
  %71 = vmatprep.subr.bf16.mxu0 0
  %72 = vmatpush1.bf16.msra.mxu0 0
  %73 = vmatprep.subr.bf16.mxu0 0
  %74 = vmatpush1.bf16.msra.mxu0 0
  %75 = vmatprep.mubr.bf16.mxu0 0
  %76 = vmatmul.mubr.bf16.gmra.mrb[0].mxu0 %v37
  %v77 = vpop.f32.mrb[0].mxu0
  %v78 = vadd.f32 %v23, %v77
  %v79 = vpop.f32.mrb[0].mxu0
  %v80 = vpop.f32.mrb[0].mxu0
  %v81 = vadd.f32 %v28, %v80
  %v82 = vpop.f32.mrb[0].mxu0
  %83 = vdwg.mxu0
  %84 = vst [vmem:[%s3] sm:$0xff] %v78
  %85 = vst [vmem:[%s3 + $0x8] sm:$0xff] %v81
  // Predicated region
  $region14: #{_lambda_.18} parent=0 // pred_check
    _
  $region15: #{_lambda_.18} parent=0 // pred_check_branch
    %87 = sbr.rel (0) target = $region17
  $region16: #{_lambda_.18} parent=0 // pred_region
    _
  $region17: #{_lambda_.18} parent=0 // pred_fallthru
    _
  // Predicated region
  $region18: #{_lambda_.18} parent=0 // pred_check
    _
  $region19: #{_lambda_.18} parent=0 // pred_check_branch
    %89 = sbr.rel (0) target = $region21
  $region20: #{_lambda_.18} parent=0 // pred_region
    _
  $region21: #{_lambda_.18} parent=0 // pred_fallthru
    _

// kernel: _lambda_.15
$region0: #{_lambda_.15}
  #allocation0 [shape = 'u32[]', space=smem, size = 0x4, offset = 0x4, fixed_abs, tag = 'smem constant byte address 0x4 - core index']
  #allocation1 [shape = 'u32[144,128]{1,0:T(1,128)}', space=vmem, size = 0x12000, scoped, tag = 'internal scratch']
  %s0 = inlined_call_operand.vmem [shape: bf16[8,72], index: 0, kind: input, shape index: {}]
  %s1 = inlined_call_operand.vmem [shape: bf16[72,128], index: 1, kind: input, shape index: {}]
  %s2 = inlined_call_operand.vmem [shape: f32[8,1], index: 2, kind: input, shape index: {}]
  %s3 = inlined_call_operand.vmem [shape: f32[8,128], index: 3, kind: output, shape index: {}]
  %s4 = sld [smem:[#allocation0]]
  $region22: #{_lambda_.15} parent=0
    _
  %s6 = ssub.s32 1, %s4
  %s7 = scalar_select 0, %s6, %s4
  // Predicated region
  $region2: #{_lambda_.15} parent=0 // pred_check
    _
  $region3: #{_lambda_.15} parent=0 // pred_check_branch
    %9 = sbr.rel (0) target = $region5
  $region4: #{_lambda_.15} parent=0 // pred_region
    _
  $region5: #{_lambda_.15} parent=0 // pred_fallthru
    _
  // Predicated region
  $region6: #{_lambda_.15} parent=0 // pred_check
    _
  $region7: #{_lambda_.15} parent=0 // pred_check_branch
    %11 = sbr.rel (0) target = $region9
  $region8: #{_lambda_.15} parent=0 // pred_region
    _
  $region9: #{_lambda_.15} parent=0 // pred_fallthru
    _
  // Predicated region
  $region10: #{_lambda_.15} parent=0 // pred_check
    _
  $region11: #{_lambda_.15} parent=0 // pred_check_branch
    %13 = sbr.rel (0) target = $region13
  $region12: #{_lambda_.15} parent=0 // pred_region
    _
  $region13: #{_lambda_.15} parent=0 // pred_fallthru
    _
  %v15 = vld [vmem:[%s0] sm:$0xf]
  %v16 = vld [vmem:[%s1] sm:$0xf]
  %v17 = vld [vmem:[%s1 + $0x4] sm:$0xf]
  %v18 = vld [vmem:[%s1 + $0x8] sm:$0xf]
  %v19 = vld [vmem:[%s1 + $0xc] sm:$0xf]
  %v20 = vld [vmem:[%s1 + $0x10] sm:$0xf]
  %v21 = vld [vmem:[%s1 + $0x14] sm:$0xf]
  %v22 = vld [vmem:[%s1 + $0x18] sm:$0xf]
  %v23 = vld [vmem:[%s1 + $0x1c] sm:$0xf]
  %v24 = vld [vmem:[%s1 + $0x20] sm:$0xf]
  %v25 = vld [vmem:[%s2] sm:$0xff]
  %27 = vset.pattern.permute.xlu0 0
  %28 = vperm.xlu0 %27, %v25
  %v29 = vpop.permute.xlu0 %28
  %v40 = vunpack.c.l.b16 %v16
  %v41 = vunpack.c.l.b16 %v17
  %v42 = vunpack.c.l.b16 %v18
  %v43 = vunpack.c.l.b16 %v19
  %v44 = vunpack.c.l.b16 %v20
  %v45 = vunpack.c.l.b16 %v21
  %v46 = vunpack.c.l.b16 %v22
  %v47 = vunpack.c.l.b16 %v23
  %v48 = vunpack.c.l.b16 %v24
  %v49 = vpack.c.b16 %v41, %v40
  %v50 = vpack.c.b16 %v43, %v42
  %v51 = vpack.c.b16 %v45, %v44
  %v52 = vpack.c.b16 %v47, %v46
  %v53 = vpack.c.b16 %v48, %v48
  %vm58 = vcmask 588800
  %v60 = vsel %vm58, %v15, 0
  %vm62 = vcmask 1043456
  %v64 = vsel %vm62, %v53, 0
  %66 = vmatprep.subr.bf16.mxu0 0
  %67 = vmatpush1.bf16.msra.mxu0 %v49
  %68 = vmatprep.subr.bf16.mxu0 0
  %69 = vmatpush1.bf16.msra.mxu0 %v50
  %70 = vmatprep.subr.bf16.mxu0 0
  %71 = vmatpush1.bf16.msra.mxu0 %v51
  %72 = vmatprep.subr.bf16.mxu0 0
  %73 = vmatpush1.bf16.msra.mxu0 %v52
  %74 = vmatprep.subr.bf16.mxu0 0
  %75 = vmatpush1.bf16.msra.mxu0 %v64
  %76 = vmatprep.subr.bf16.mxu0 0
  %77 = vmatpush1.bf16.msra.mxu0 0
  %78 = vmatprep.subr.bf16.mxu0 0
  %79 = vmatpush1.bf16.msra.mxu0 0
  %80 = vmatprep.subr.bf16.mxu0 0
  %81 = vmatpush1.bf16.msra.mxu0 0
  %82 = vmatprep.subr.bf16.mxu0 0
  %83 = vmatpush1.bf16.msra.mxu0 0
  %84 = vmatprep.subr.bf16.mxu0 0
  %85 = vmatpush1.bf16.msra.mxu0 0
  %86 = vmatprep.subr.bf16.mxu0 0
  %87 = vmatpush1.bf16.msra.mxu0 0
  %88 = vmatprep.subr.bf16.mxu0 0
  %89 = vmatpush1.bf16.msra.mxu0 0
  %90 = vmatprep.subr.bf16.mxu0 0
  %91 = vmatpush1.bf16.msra.mxu0 0
  %92 = vmatprep.subr.bf16.mxu0 0
  %93 = vmatpush1.bf16.msra.mxu0 0
  %94 = vmatprep.subr.bf16.mxu0 0
  %95 = vmatpush1.bf16.msra.mxu0 0
  %96 = vmatprep.subr.bf16.mxu0 0
  %97 = vmatpush1.bf16.msra.mxu0 0
  %98 = vmatprep.mubr.bf16.mxu0 0
  %99 = vmatmul.mubr.bf16.gmra.mrb[0].mxu0 %v60
  %v100 = vpop.f32.mrb[0].mxu0
  %v101 = vadd.f32 %v29, %v100
  %v102 = vpop.f32.mrb[0].mxu0
  %v103 = vpop.f32.mrb[0].mxu0
  %v104 = vpop.f32.mrb[0].mxu0
  %105 = vdwg.mxu0
  %v106 = vmax.f32 %v101, 0.0
  %107 = vst [vmem:[%s3] sm:$0xff] %v106
  // Predicated region
  $region14: #{_lambda_.15} parent=0 // pred_check
    _
  $region15: #{_lambda_.15} parent=0 // pred_check_branch
    %109 = sbr.rel (0) target = $region17
  $region16: #{_lambda_.15} parent=0 // pred_region
    _
  $region17: #{_lambda_.15} parent=0 // pred_fallthru
    _
  // Predicated region
  $region18: #{_lambda_.15} parent=0 // pred_check
    _
  $region19: #{_lambda_.15} parent=0 // pred_check_branch
    %111 = sbr.rel (0) target = $region21
  $region20: #{_lambda_.15} parent=0 // pred_region
    _
  $region21: #{_lambda_.15} parent=0 // pred_fallthru
    _

// kernel: _lambda_.19
$region0: #{_lambda_.19}
  #allocation0 [shape = 'u32[]', space=smem, size = 0x4, offset = 0x4, fixed_abs, tag = 'smem constant byte address 0x4 - core index']
  #allocation1 [shape = 'u32[144,128]{1,0:T(1,128)}', space=vmem, size = 0x12000, scoped, tag = 'internal scratch']
  %s0 = inlined_call_operand.vmem [shape: bf16[4,72], index: 0, kind: input, shape index: {}]
  %s1 = inlined_call_operand.vmem [shape: bf16[72,512], index: 1, kind: input, shape index: {}]
  %s2 = inlined_call_operand.vmem [shape: f32[4,1], index: 2, kind: input, shape index: {}]
  %s3 = inlined_call_operand.vmem [shape: f32[4,512], index: 3, kind: output, shape index: {}]
  %s4 = sld [smem:[#allocation0]]
  $region22: #{_lambda_.19} parent=0
    _
  %s6 = ssub.s32 1, %s4
  %s7 = scalar_select 0, %s6, %s4
  // Predicated region
  $region2: #{_lambda_.19} parent=0 // pred_check
    _
  $region3: #{_lambda_.19} parent=0 // pred_check_branch
    %9 = sbr.rel (0) target = $region5
  $region4: #{_lambda_.19} parent=0 // pred_region
    _
  $region5: #{_lambda_.19} parent=0 // pred_fallthru
    _
  // Predicated region
  $region6: #{_lambda_.19} parent=0 // pred_check
    _
  $region7: #{_lambda_.19} parent=0 // pred_check_branch
    %11 = sbr.rel (0) target = $region9
  $region8: #{_lambda_.19} parent=0 // pred_region
    _
  $region9: #{_lambda_.19} parent=0 // pred_fallthru
    _
  // Predicated region
  $region10: #{_lambda_.19} parent=0 // pred_check
    _
  $region11: #{_lambda_.19} parent=0 // pred_check_branch
    %13 = sbr.rel (0) target = $region13
  $region12: #{_lambda_.19} parent=0 // pred_region
    _
  $region13: #{_lambda_.19} parent=0 // pred_fallthru
    _
  %v15 = vld [vmem:[%s0] sm:$0x3]
  %v16 = vld [vmem:[%s1] sm:$0xff]
  %v17 = vld [vmem:[%s1 + $0x8] sm:$0xff]
  %v18 = vld [vmem:[%s1 + $0x10] sm:$0xff]
  %v19 = vld [vmem:[%s1 + $0x18] sm:$0xff]
  %v20 = vld [vmem:[%s1 + $0x20] sm:$0xff]
  %v21 = vld [vmem:[%s1 + $0x28] sm:$0xff]
  %v22 = vld [vmem:[%s1 + $0x30] sm:$0xff]
  %v23 = vld [vmem:[%s1 + $0x38] sm:$0xff]
  %v24 = vld [vmem:[%s1 + $0x40] sm:$0xff]
  %v25 = vld [vmem:[%s1 + $0x48] sm:$0xff]
  %v26 = vld [vmem:[%s1 + $0x50] sm:$0xff]
  %v27 = vld [vmem:[%s1 + $0x58] sm:$0xff]
  %v28 = vld [vmem:[%s1 + $0x60] sm:$0xff]
  %v29 = vld [vmem:[%s1 + $0x68] sm:$0xff]
  %v30 = vld [vmem:[%s1 + $0x70] sm:$0xff]
  %v31 = vld [vmem:[%s1 + $0x78] sm:$0xff]
  %v32 = vld [vmem:[%s1 + $0x80] sm:$0xff]
  %v33 = vld [vmem:[%s1 + $0x88] sm:$0xff]
  %v34 = vld [vmem:[%s2] sm:$0xf]
  %36 = vset.pattern.permute.xlu0 0
  %37 = vperm.xlu0 %36, %v34
  %v38 = vpop.permute.xlu0 %37
  %v58 = vunpack.c.l.b16 %v16
  %v59 = vunpack.c.h.b16 %v16
  %v60 = vunpack.c.l.b16 %v17
  %v61 = vunpack.c.h.b16 %v17
  %v62 = vunpack.c.l.b16 %v18
  %v63 = vunpack.c.h.b16 %v18
  %v64 = vunpack.c.l.b16 %v19
  %v65 = vunpack.c.h.b16 %v19
  %v66 = vunpack.c.l.b16 %v20
  %v67 = vunpack.c.h.b16 %v20
  %v68 = vunpack.c.l.b16 %v21
  %v69 = vunpack.c.h.b16 %v21
  %v70 = vunpack.c.l.b16 %v22
  %v71 = vunpack.c.h.b16 %v22
  %v72 = vunpack.c.l.b16 %v23
  %v73 = vunpack.c.h.b16 %v23
  %v74 = vunpack.c.l.b16 %v24
  %v75 = vunpack.c.h.b16 %v24
  %v76 = vunpack.c.l.b16 %v25
  %v77 = vunpack.c.h.b16 %v25
  %v78 = vunpack.c.l.b16 %v26
  %v79 = vunpack.c.h.b16 %v26
  %v80 = vunpack.c.l.b16 %v27
  %v81 = vunpack.c.h.b16 %v27
  %v82 = vunpack.c.l.b16 %v28
  %v83 = vunpack.c.h.b16 %v28
  %v84 = vunpack.c.l.b16 %v29
  %v85 = vunpack.c.h.b16 %v29
  %v86 = vunpack.c.l.b16 %v30
  %v87 = vunpack.c.h.b16 %v30
  %v88 = vunpack.c.l.b16 %v31
  %v89 = vunpack.c.h.b16 %v31
  %v90 = vunpack.c.l.b16 %v32
  %v91 = vunpack.c.h.b16 %v32
  %v92 = vunpack.c.l.b16 %v33
  %v93 = vunpack.c.h.b16 %v33
  %v94 = vpack.c.b16 %v62, %v58
  %v95 = vpack.c.b16 %v63, %v59
  %v96 = vpack.c.b16 %v64, %v60
  %v97 = vpack.c.b16 %v65, %v61
  %v98 = vpack.c.b16 %v70, %v66
  %v99 = vpack.c.b16 %v71, %v67
  %v100 = vpack.c.b16 %v72, %v68
  %v101 = vpack.c.b16 %v73, %v69
  %v102 = vpack.c.b16 %v78, %v74
  %v103 = vpack.c.b16 %v79, %v75
  %v104 = vpack.c.b16 %v80, %v76
  %v105 = vpack.c.b16 %v81, %v77
  %v106 = vpack.c.b16 %v86, %v82
  %v107 = vpack.c.b16 %v87, %v83
  %v108 = vpack.c.b16 %v88, %v84
  %v109 = vpack.c.b16 %v89, %v85
  %v110 = vpack.c.b16 %v90, %v90
  %v111 = vpack.c.b16 %v91, %v91
  %v112 = vpack.c.b16 %v92, %v92
  %v113 = vpack.c.b16 %v93, %v93
  %vm130 = vcmask 588800
  %v132 = vsel %vm130, %v15, 0
  %vm134 = vcmask 1043456
  %v136 = vsel %vm134, %v110, 0
  %v139 = vsel %vm134, %v111, 0
  %v142 = vsel %vm134, %v112, 0
  %v145 = vsel %vm134, %v113, 0
  %147 = vmatprep.subr.bf16.mxu0 %v95
  %148 = vmatpush1.bf16.msra.mxu0 %v94
  %149 = vmatprep.subr.bf16.mxu0 %v99
  %150 = vmatpush1.bf16.msra.mxu0 %v98
  %151 = vmatprep.subr.bf16.mxu0 %v103
  %152 = vmatpush1.bf16.msra.mxu0 %v102
  %153 = vmatprep.subr.bf16.mxu0 %v107
  %154 = vmatpush1.bf16.msra.mxu0 %v106
  %155 = vmatprep.subr.bf16.mxu0 %v139
  %156 = vmatpush1.bf16.msra.mxu0 %v136
  %157 = vmatprep.subr.bf16.mxu0 0
  %158 = vmatpush1.bf16.msra.mxu0 0
  %159 = vmatprep.subr.bf16.mxu0 0
  %160 = vmatpush1.bf16.msra.mxu0 0
  %161 = vmatprep.subr.bf16.mxu0 0
  %162 = vmatpush1.bf16.msra.mxu0 0
  %163 = vmatprep.subr.bf16.mxu0 0
  %164 = vmatpush1.bf16.msra.mxu0 0
  %165 = vmatprep.subr.bf16.mxu0 0
  %166 = vmatpush1.bf16.msra.mxu0 0
  %167 = vmatprep.subr.bf16.mxu0 0
  %168 = vmatpush1.bf16.msra.mxu0 0
  %169 = vmatprep.subr.bf16.mxu0 0
  %170 = vmatpush1.bf16.msra.mxu0 0
  %171 = vmatprep.subr.bf16.mxu0 0
  %172 = vmatpush1.bf16.msra.mxu0 0
  %173 = vmatprep.subr.bf16.mxu0 0
  %174 = vmatpush1.bf16.msra.mxu0 0
  %175 = vmatprep.subr.bf16.mxu0 0
  %176 = vmatpush1.bf16.msra.mxu0 0
  %177 = vmatprep.subr.bf16.mxu0 0
  %178 = vmatpush1.bf16.msra.mxu0 0
  %179 = vmatprep.mubr.bf16.mxu0 0
  %180 = vmatmul.mubr.bf16.gmra.mrb[0].mxu0 %v132
  %v181 = vpop.f32.mrb[0].mxu0
  %v182 = vadd.f32 %v38, %v181
  %v183 = vpop.f32.mrb[0].mxu0
  %v184 = vadd.f32 %v38, %v183
  %v185 = vpop.f32.mrb[0].mxu0
  %v186 = vpop.f32.mrb[0].mxu0
  %187 = vdwg.mxu0
  %188 = vmatprep.subr.bf16.mxu0 %v97
  %189 = vmatpush1.bf16.msra.mxu0 %v96
  %190 = vmatprep.subr.bf16.mxu0 %v101
  %191 = vmatpush1.bf16.msra.mxu0 %v100
  %192 = vmatprep.subr.bf16.mxu0 %v105
  %193 = vmatpush1.bf16.msra.mxu0 %v104
  %194 = vmatprep.subr.bf16.mxu0 %v109
  %195 = vmatpush1.bf16.msra.mxu0 %v108
  %196 = vmatprep.subr.bf16.mxu0 %v145
  %197 = vmatpush1.bf16.msra.mxu0 %v142
  %198 = vmatprep.subr.bf16.mxu0 0
  %199 = vmatpush1.bf16.msra.mxu0 0
  %200 = vmatprep.subr.bf16.mxu0 0
  %201 = vmatpush1.bf16.msra.mxu0 0
  %202 = vmatprep.subr.bf16.mxu0 0
  %203 = vmatpush1.bf16.msra.mxu0 0
  %204 = vmatprep.subr.bf16.mxu0 0
  %205 = vmatpush1.bf16.msra.mxu0 0
  %206 = vmatprep.subr.bf16.mxu0 0
  %207 = vmatpush1.bf16.msra.mxu0 0
  %208 = vmatprep.subr.bf16.mxu0 0
  %209 = vmatpush1.bf16.msra.mxu0 0
  %210 = vmatprep.subr.bf16.mxu0 0
  %211 = vmatpush1.bf16.msra.mxu0 0
  %212 = vmatprep.subr.bf16.mxu0 0
  %213 = vmatpush1.bf16.msra.mxu0 0
  %214 = vmatprep.subr.bf16.mxu0 0
  %215 = vmatpush1.bf16.msra.mxu0 0
  %216 = vmatprep.subr.bf16.mxu0 0
  %217 = vmatpush1.bf16.msra.mxu0 0
  %218 = vmatprep.subr.bf16.mxu0 0
  %219 = vmatpush1.bf16.msra.mxu0 0
  %220 = vmatprep.mubr.bf16.mxu0 0
  %221 = vmatmul.mubr.bf16.gmra.mrb[0].mxu0 %v132
  %v222 = vpop.f32.mrb[0].mxu0
  %v223 = vadd.f32 %v38, %v222
  %v224 = vpop.f32.mrb[0].mxu0
  %v225 = vadd.f32 %v38, %v224
  %v226 = vpop.f32.mrb[0].mxu0
  %v227 = vpop.f32.mrb[0].mxu0
  %228 = vdwg.mxu0
  %v229 = vmax.f32 %v182, 0.0
  %v230 = vmax.f32 %v184, 0.0
  %v231 = vmax.f32 %v223, 0.0
  %v232 = vmax.f32 %v225, 0.0
  %v237 = vcombine.low %v229, %v230
  %v238 = vcombine.low %v231, %v232
  %241 = vst [vmem:[%s3] sm:$0xff] %v237
  %242 = vst [vmem:[%s3 + $0x8] sm:$0xff] %v238
  // Predicated region
  $region14: #{_lambda_.19} parent=0 // pred_check
    _
  $region15: #{_lambda_.19} parent=0 // pred_check_branch
    %244 = sbr.rel (0) target = $region17
  $region16: #{_lambda_.19} parent=0 // pred_region
    _
  $region17: #{_lambda_.19} parent=0 // pred_fallthru
    _
  // Predicated region
  $region18: #{_lambda_.19} parent=0 // pred_check
    _
  $region19: #{_lambda_.19} parent=0 // pred_check_branch
    %246 = sbr.rel (0) target = $region21
  $region20: #{_lambda_.19} parent=0 // pred_region
    _
  $region21: #{_lambda_.19} parent=0 // pred_fallthru
    _

// kernel: _lambda_.20
$region0: #{_lambda_.20}
  #allocation0 [shape = 'u32[]', space=smem, size = 0x4, offset = 0x4, fixed_abs, tag = 'smem constant byte address 0x4 - core index']
  #allocation1 [shape = 'u32[144,128]{1,0:T(1,128)}', space=vmem, size = 0x12000, scoped, tag = 'internal scratch']
  %s0 = inlined_call_operand.vmem [shape: bf16[4,36], index: 0, kind: input, shape index: {}]
  %s1 = inlined_call_operand.vmem [shape: bf16[36,512], index: 1, kind: input, shape index: {}]
  %s2 = inlined_call_operand.vmem [shape: f32[4,1], index: 2, kind: input, shape index: {}]
  %s3 = inlined_call_operand.vmem [shape: f32[4,512], index: 3, kind: output, shape index: {}]
  %s4 = sld [smem:[#allocation0]]
  $region22: #{_lambda_.20} parent=0
    _
  %s6 = ssub.s32 1, %s4
  %s7 = scalar_select 0, %s6, %s4
  // Predicated region
  $region2: #{_lambda_.20} parent=0 // pred_check
    _
  $region3: #{_lambda_.20} parent=0 // pred_check_branch
    %9 = sbr.rel (0) target = $region5
  $region4: #{_lambda_.20} parent=0 // pred_region
    _
  $region5: #{_lambda_.20} parent=0 // pred_fallthru
    _
  // Predicated region
  $region6: #{_lambda_.20} parent=0 // pred_check
    _
  $region7: #{_lambda_.20} parent=0 // pred_check_branch
    %11 = sbr.rel (0) target = $region9
  $region8: #{_lambda_.20} parent=0 // pred_region
    _
  $region9: #{_lambda_.20} parent=0 // pred_fallthru
    _
  // Predicated region
  $region10: #{_lambda_.20} parent=0 // pred_check
    _
  $region11: #{_lambda_.20} parent=0 // pred_check_branch
    %13 = sbr.rel (0) target = $region13
  $region12: #{_lambda_.20} parent=0 // pred_region
    _
  $region13: #{_lambda_.20} parent=0 // pred_fallthru
    _
  %v15 = vld [vmem:[%s0] sm:$0x3]
  %v16 = vld [vmem:[%s1] sm:$0xff]
  %v17 = vld [vmem:[%s1 + $0x8] sm:$0xff]
  %v18 = vld [vmem:[%s1 + $0x10] sm:$0xff]
  %v19 = vld [vmem:[%s1 + $0x18] sm:$0xff]
  %v20 = vld [vmem:[%s1 + $0x20] sm:$0xff]
  %v21 = vld [vmem:[%s1 + $0x28] sm:$0xff]
  %v22 = vld [vmem:[%s1 + $0x30] sm:$0xff]
  %v23 = vld [vmem:[%s1 + $0x38] sm:$0xff]
  %v24 = vld [vmem:[%s1 + $0x40] sm:$0x33]
  %v25 = vld [vmem:[%s1 + $0x48] sm:$0x33]
  %v26 = vld [vmem:[%s2] sm:$0xf]
  %28 = vset.pattern.permute.xlu0 0
  %29 = vperm.xlu0 %28, %v26
  %v30 = vpop.permute.xlu0 %29
  %v42 = vunpack.c.l.b16 %v16
  %v43 = vunpack.c.h.b16 %v16
  %v44 = vunpack.c.l.b16 %v17
  %v45 = vunpack.c.h.b16 %v17
  %v46 = vunpack.c.l.b16 %v18
  %v47 = vunpack.c.h.b16 %v18
  %v48 = vunpack.c.l.b16 %v19
  %v49 = vunpack.c.h.b16 %v19
  %v50 = vunpack.c.l.b16 %v20
  %v51 = vunpack.c.h.b16 %v20
  %v52 = vunpack.c.l.b16 %v21
  %v53 = vunpack.c.h.b16 %v21
  %v54 = vunpack.c.l.b16 %v22
  %v55 = vunpack.c.h.b16 %v22
  %v56 = vunpack.c.l.b16 %v23
  %v57 = vunpack.c.h.b16 %v23
  %v58 = vunpack.c.l.b16 %v24
  %v59 = vunpack.c.h.b16 %v24
  %v60 = vunpack.c.l.b16 %v25
  %v61 = vunpack.c.h.b16 %v25
  %v62 = vpack.c.b16 %v46, %v42
  %v63 = vpack.c.b16 %v47, %v43
  %v64 = vpack.c.b16 %v48, %v44
  %v65 = vpack.c.b16 %v49, %v45
  %v66 = vpack.c.b16 %v54, %v50
  %v67 = vpack.c.b16 %v55, %v51
  %v68 = vpack.c.b16 %v56, %v52
  %v69 = vpack.c.b16 %v57, %v53
  %v70 = vpack.c.b16 %v58, %v58
  %v71 = vpack.c.b16 %v59, %v59
  %v72 = vpack.c.b16 %v60, %v60
  %v73 = vpack.c.b16 %v61, %v61
  %vm82 = vcmask 293888
  %v84 = vsel %vm82, %v15, 0
  %vm86 = vcmask 1041408
  %v88 = vsel %vm86, %v70, 0
  %v91 = vsel %vm86, %v71, 0
  %v94 = vsel %vm86, %v72, 0
  %v97 = vsel %vm86, %v73, 0
  %99 = vmatprep.subr.bf16.mxu0 %v63
  %100 = vmatpush1.bf16.msra.mxu0 %v62
  %101 = vmatprep.subr.bf16.mxu0 %v67
  %102 = vmatpush1.bf16.msra.mxu0 %v66
  %103 = vmatprep.subr.bf16.mxu0 %v91
  %104 = vmatpush1.bf16.msra.mxu0 %v88
  %105 = vmatprep.subr.bf16.mxu0 0
  %106 = vmatpush1.bf16.msra.mxu0 0
  %107 = vmatprep.subr.bf16.mxu0 0
  %108 = vmatpush1.bf16.msra.mxu0 0
  %109 = vmatprep.subr.bf16.mxu0 0
  %110 = vmatpush1.bf16.msra.mxu0 0
  %111 = vmatprep.subr.bf16.mxu0 0
  %112 = vmatpush1.bf16.msra.mxu0 0
  %113 = vmatprep.subr.bf16.mxu0 0
  %114 = vmatpush1.bf16.msra.mxu0 0
  %115 = vmatprep.subr.bf16.mxu0 0
  %116 = vmatpush1.bf16.msra.mxu0 0
  %117 = vmatprep.subr.bf16.mxu0 0
  %118 = vmatpush1.bf16.msra.mxu0 0
  %119 = vmatprep.subr.bf16.mxu0 0
  %120 = vmatpush1.bf16.msra.mxu0 0
  %121 = vmatprep.subr.bf16.mxu0 0
  %122 = vmatpush1.bf16.msra.mxu0 0
  %123 = vmatprep.subr.bf16.mxu0 0
  %124 = vmatpush1.bf16.msra.mxu0 0
  %125 = vmatprep.subr.bf16.mxu0 0
  %126 = vmatpush1.bf16.msra.mxu0 0
  %127 = vmatprep.subr.bf16.mxu0 0
  %128 = vmatpush1.bf16.msra.mxu0 0
  %129 = vmatprep.subr.bf16.mxu0 0
  %130 = vmatpush1.bf16.msra.mxu0 0
  %131 = vmatprep.mubr.bf16.mxu0 0
  %132 = vmatmul.mubr.bf16.gmra.mrb[0].mxu0 %v84
  %v133 = vpop.f32.mrb[0].mxu0
  %v134 = vadd.f32 %v30, %v133
  %v135 = vpop.f32.mrb[0].mxu0
  %v136 = vadd.f32 %v30, %v135
  %v137 = vpop.f32.mrb[0].mxu0
  %v138 = vpop.f32.mrb[0].mxu0
  %139 = vdwg.mxu0
  %140 = vmatprep.subr.bf16.mxu0 %v65
  %141 = vmatpush1.bf16.msra.mxu0 %v64
  %142 = vmatprep.subr.bf16.mxu0 %v69
  %143 = vmatpush1.bf16.msra.mxu0 %v68
  %144 = vmatprep.subr.bf16.mxu0 %v97
  %145 = vmatpush1.bf16.msra.mxu0 %v94
  %146 = vmatprep.subr.bf16.mxu0 0
  %147 = vmatpush1.bf16.msra.mxu0 0
  %148 = vmatprep.subr.bf16.mxu0 0
  %149 = vmatpush1.bf16.msra.mxu0 0
  %150 = vmatprep.subr.bf16.mxu0 0
  %151 = vmatpush1.bf16.msra.mxu0 0
  %152 = vmatprep.subr.bf16.mxu0 0
  %153 = vmatpush1.bf16.msra.mxu0 0
  %154 = vmatprep.subr.bf16.mxu0 0
  %155 = vmatpush1.bf16.msra.mxu0 0
  %156 = vmatprep.subr.bf16.mxu0 0
  %157 = vmatpush1.bf16.msra.mxu0 0
  %158 = vmatprep.subr.bf16.mxu0 0
  %159 = vmatpush1.bf16.msra.mxu0 0
  %160 = vmatprep.subr.bf16.mxu0 0
  %161 = vmatpush1.bf16.msra.mxu0 0
  %162 = vmatprep.subr.bf16.mxu0 0
  %163 = vmatpush1.bf16.msra.mxu0 0
  %164 = vmatprep.subr.bf16.mxu0 0
  %165 = vmatpush1.bf16.msra.mxu0 0
  %166 = vmatprep.subr.bf16.mxu0 0
  %167 = vmatpush1.bf16.msra.mxu0 0
  %168 = vmatprep.subr.bf16.mxu0 0
  %169 = vmatpush1.bf16.msra.mxu0 0
  %170 = vmatprep.subr.bf16.mxu0 0
  %171 = vmatpush1.bf16.msra.mxu0 0
  %172 = vmatprep.mubr.bf16.mxu0 0
  %173 = vmatmul.mubr.bf16.gmra.mrb[0].mxu0 %v84
  %v174 = vpop.f32.mrb[0].mxu0
  %v175 = vadd.f32 %v30, %v174
  %v176 = vpop.f32.mrb[0].mxu0
  %v177 = vadd.f32 %v30, %v176
  %v178 = vpop.f32.mrb[0].mxu0
  %v179 = vpop.f32.mrb[0].mxu0
  %180 = vdwg.mxu0
  %v181 = vmax.f32 %v134, 0.0
  %v182 = vmax.f32 %v136, 0.0
  %v183 = vmax.f32 %v175, 0.0
  %v184 = vmax.f32 %v177, 0.0
  %v189 = vcombine.low %v181, %v182
  %v190 = vcombine.low %v183, %v184
  %193 = vst [vmem:[%s3] sm:$0xff] %v189
  %194 = vst [vmem:[%s3 + $0x8] sm:$0xff] %v190
  // Predicated region
  $region14: #{_lambda_.20} parent=0 // pred_check
    _
  $region15: #{_lambda_.20} parent=0 // pred_check_branch
    %196 = sbr.rel (0) target = $region17
  $region16: #{_lambda_.20} parent=0 // pred_region
    _
  $region17: #{_lambda_.20} parent=0 // pred_fallthru
    _
  // Predicated region
  $region18: #{_lambda_.20} parent=0 // pred_check
    _
  $region19: #{_lambda_.20} parent=0 // pred_check_branch
    %198 = sbr.rel (0) target = $region21
  $region20: #{_lambda_.20} parent=0 // pred_region
    _
  $region21: #{_lambda_.20} parent=0 // pred_fallthru
    _

// kernel: _lambda_.21
$region0: #{_lambda_.21}
  #allocation0 [shape = 'u32[]', space=smem, size = 0x4, offset = 0x4, fixed_abs, tag = 'smem constant byte address 0x4 - core index']
  #allocation1 [shape = 'u32[144,128]{1,0:T(1,128)}', space=vmem, size = 0x12000, scoped, tag = 'internal scratch']
  %s0 = inlined_call_operand.vmem [shape: bf16[3,4], index: 0, kind: input, shape index: {}]
  %s1 = inlined_call_operand.vmem [shape: bf16[4,512], index: 1, kind: input, shape index: {}]
  %s2 = inlined_call_operand.vmem [shape: f32[3,1], index: 2, kind: input, shape index: {}]
  %s3 = inlined_call_operand.vmem [shape: f32[3,512], index: 3, kind: output, shape index: {}]
  %s4 = sld [smem:[#allocation0]]
  $region22: #{_lambda_.21} parent=0
    _
  %s6 = ssub.s32 1, %s4
  %s7 = scalar_select 0, %s6, %s4
  // Predicated region
  $region2: #{_lambda_.21} parent=0 // pred_check
    _
  $region3: #{_lambda_.21} parent=0 // pred_check_branch
    %9 = sbr.rel (0) target = $region5
  $region4: #{_lambda_.21} parent=0 // pred_region
    _
  $region5: #{_lambda_.21} parent=0 // pred_fallthru
    _
  // Predicated region
  $region6: #{_lambda_.21} parent=0 // pred_check
    _
  $region7: #{_lambda_.21} parent=0 // pred_check_branch
    %11 = sbr.rel (0) target = $region9
  $region8: #{_lambda_.21} parent=0 // pred_region
    _
  $region9: #{_lambda_.21} parent=0 // pred_fallthru
    _
  // Predicated region
  $region10: #{_lambda_.21} parent=0 // pred_check
    _
  $region11: #{_lambda_.21} parent=0 // pred_check_branch
    %13 = sbr.rel (0) target = $region13
  $region12: #{_lambda_.21} parent=0 // pred_region
    _
  $region13: #{_lambda_.21} parent=0 // pred_fallthru
    _
  %v15 = vld [vmem:[%s0] sm:$0x3]
  %v16 = vld [vmem:[%s1] sm:$0xff]
  %v17 = vld [vmem:[%s2] sm:$0x7]
  %19 = vset.pattern.permute.xlu0 0
  %20 = vperm.xlu0 %19, %v17
  %v21 = vpop.permute.xlu0 %20
  %v24 = vcombine.high %v16, %v16
  %v26 = vunpack.c.l.s4 1983009808
  %v27 = vunpack.c.0.s8 %v26
  %v28 = vlaneseq
  %v29 = vshrl.u32 %v28, 7
  %v30 = vsub.s32 %v27, %v29
  %v31 = vrot.slane %v16, %v30
  %v33 = vunpack.c.l.s4 1983009808
  %v34 = vunpack.c.0.s8 %v33
  %v35 = vlaneseq
  %v36 = vshrl.u32 %v35, 7
  %v37 = vsub.s32 %v34, %v36
  %v38 = vrot.slane %v24, %v37
  %v39 = vcombine.high %v31, %v31
  %v40 = vcombine.high %v38, %v38
  %vm41 = vcmask 31744
  %v43 = vsel %vm41, %v15, 0
  %vm45 = vcmask 1041408
  %v47 = vsel %vm45, %v31, 0
  %v50 = vsel %vm45, %v39, 0
  %v53 = vsel %vm45, %v38, 0
  %v56 = vsel %vm45, %v40, 0
  %58 = vmatprep.subr.bf16.mxu0 %v50
  %59 = vmatpush1.bf16.msra.mxu0 %v47
  %60 = vmatprep.subr.bf16.mxu0 0
  %61 = vmatpush1.bf16.msra.mxu0 0
  %62 = vmatprep.subr.bf16.mxu0 0
  %63 = vmatpush1.bf16.msra.mxu0 0
  %64 = vmatprep.subr.bf16.mxu0 0
  %65 = vmatpush1.bf16.msra.mxu0 0
  %66 = vmatprep.subr.bf16.mxu0 0
  %67 = vmatpush1.bf16.msra.mxu0 0
  %68 = vmatprep.subr.bf16.mxu0 0
  %69 = vmatpush1.bf16.msra.mxu0 0
  %70 = vmatprep.subr.bf16.mxu0 0
  %71 = vmatpush1.bf16.msra.mxu0 0
  %72 = vmatprep.subr.bf16.mxu0 0
  %73 = vmatpush1.bf16.msra.mxu0 0
  %74 = vmatprep.subr.bf16.mxu0 0
  %75 = vmatpush1.bf16.msra.mxu0 0
  %76 = vmatprep.subr.bf16.mxu0 0
  %77 = vmatpush1.bf16.msra.mxu0 0
  %78 = vmatprep.subr.bf16.mxu0 0
  %79 = vmatpush1.bf16.msra.mxu0 0
  %80 = vmatprep.subr.bf16.mxu0 0
  %81 = vmatpush1.bf16.msra.mxu0 0
  %82 = vmatprep.subr.bf16.mxu0 0
  %83 = vmatpush1.bf16.msra.mxu0 0
  %84 = vmatprep.subr.bf16.mxu0 0
  %85 = vmatpush1.bf16.msra.mxu0 0
  %86 = vmatprep.subr.bf16.mxu0 0
  %87 = vmatpush1.bf16.msra.mxu0 0
  %88 = vmatprep.subr.bf16.mxu0 0
  %89 = vmatpush1.bf16.msra.mxu0 0
  %90 = vmatprep.mubr.bf16.mxu0 0
  %91 = vmatmul.mubr.bf16.gmra.mrb[0].mxu0 %v43
  %v92 = vpop.f32.mrb[0].mxu0
  %v93 = vadd.f32 %v21, %v92
  %v94 = vpop.f32.mrb[0].mxu0
  %v95 = vadd.f32 %v21, %v94
  %v96 = vpop.f32.mrb[0].mxu0
  %v97 = vpop.f32.mrb[0].mxu0
  %98 = vdwg.mxu0
  %99 = vmatprep.subr.bf16.mxu0 %v56
  %100 = vmatpush1.bf16.msra.mxu0 %v53
  %101 = vmatprep.subr.bf16.mxu0 0
  %102 = vmatpush1.bf16.msra.mxu0 0
  %103 = vmatprep.subr.bf16.mxu0 0
  %104 = vmatpush1.bf16.msra.mxu0 0
  %105 = vmatprep.subr.bf16.mxu0 0
  %106 = vmatpush1.bf16.msra.mxu0 0
  %107 = vmatprep.subr.bf16.mxu0 0
  %108 = vmatpush1.bf16.msra.mxu0 0
  %109 = vmatprep.subr.bf16.mxu0 0
  %110 = vmatpush1.bf16.msra.mxu0 0
  %111 = vmatprep.subr.bf16.mxu0 0
  %112 = vmatpush1.bf16.msra.mxu0 0
  %113 = vmatprep.subr.bf16.mxu0 0
  %114 = vmatpush1.bf16.msra.mxu0 0
  %115 = vmatprep.subr.bf16.mxu0 0
  %116 = vmatpush1.bf16.msra.mxu0 0
  %117 = vmatprep.subr.bf16.mxu0 0
  %118 = vmatpush1.bf16.msra.mxu0 0
  %119 = vmatprep.subr.bf16.mxu0 0
  %120 = vmatpush1.bf16.msra.mxu0 0
  %121 = vmatprep.subr.bf16.mxu0 0
  %122 = vmatpush1.bf16.msra.mxu0 0
  %123 = vmatprep.subr.bf16.mxu0 0
  %124 = vmatpush1.bf16.msra.mxu0 0
  %125 = vmatprep.subr.bf16.mxu0 0
  %126 = vmatpush1.bf16.msra.mxu0 0
  %127 = vmatprep.subr.bf16.mxu0 0
  %128 = vmatpush1.bf16.msra.mxu0 0
  %129 = vmatprep.subr.bf16.mxu0 0
  %130 = vmatpush1.bf16.msra.mxu0 0
  %131 = vmatprep.mubr.bf16.mxu0 0
  %132 = vmatmul.mubr.bf16.gmra.mrb[0].mxu0 %v43
  %v133 = vpop.f32.mrb[0].mxu0
  %v134 = vadd.f32 %v21, %v133
  %v135 = vpop.f32.mrb[0].mxu0
  %v136 = vadd.f32 %v21, %v135
  %v137 = vpop.f32.mrb[0].mxu0
  %v138 = vpop.f32.mrb[0].mxu0
  %139 = vdwg.mxu0
  %v144 = vcombine.low %v93, %v95
  %v145 = vcombine.low %v134, %v136
  %148 = vst [vmem:[%s3] sm:$0x77] %v144
  %149 = vst [vmem:[%s3 + $0x8] sm:$0x77] %v145
  // Predicated region
  $region14: #{_lambda_.21} parent=0 // pred_check
    _
  $region15: #{_lambda_.21} parent=0 // pred_check_branch
    %151 = sbr.rel (0) target = $region17
  $region16: #{_lambda_.21} parent=0 // pred_region
    _
  $region17: #{_lambda_.21} parent=0 // pred_fallthru
    _
  // Predicated region
  $region18: #{_lambda_.21} parent=0 // pred_check
    _
  $region19: #{_lambda_.21} parent=0 // pred_check_branch
    %153 = sbr.rel (0) target = $region21
  $region20: #{_lambda_.21} parent=0 // pred_region
    _
  $region21: #{_lambda_.21} parent=0 // pred_fallthru
    _

</llo_original>
